<compile_context>
chip_gen: v7x
topology: tpu7x:2x2x1
jax: 0.10.0
libtpu: 0.0.40
codegen_flags: <defaults>
</compile_context>

<pallas_src>
import functools

import jax
import jax.numpy as jnp
from jax.experimental import pallas as pl
from jax.experimental.pallas import tpu as pltpu


# ----------------------------- Pallas kernel ---------------------------------


def _iresnet_kernel(x_ref, u_ref,
                    w1_ref, b1_ref, w2_ref, b2_ref, w3_ref, b3_ref,
                    w1t_ref, w2t_ref, w3t_ref,
                    y_ref, ld_ref, *, k):
    """One grid step = one batch sample.

    x_ref : (1, 1, Cin)      sample
    u_ref : (1, n, Cin)      Hutchinson probe vectors for this sample
    w*    : forward-layout weights (in_features, out_features); b*: (1, out)
    w*t   : transposed copies (== torch weight layout) used by the VJP chain
    y_ref : (1, 1, Cin)      x + residual(x)
    ld_ref: (1, 1, 1)        log-det estimate for this sample
    """
    x = x_ref[0]                      # (1, Cin)
    u = u_ref[0]                      # (n, Cin)
    w1, w2, w3 = w1_ref[...], w2_ref[...], w3_ref[...]
    b1, b2, b3 = b1_ref[...], b2_ref[...], b3_ref[...]
    w1t, w2t, w3t = w1t_ref[...], w2t_ref[...], w3t_ref[...]

    def elu_and_grad(a):
        # ELU(alpha=1) and its derivative, sharing one EUP exp.
        e = jnp.exp(jnp.minimum(a, 0.0))
        return jnp.where(a > 0, a, e - 1.0), jnp.where(a > 0, 1.0, e)

    # ---- residual MLP forward:  ELU -> L1 -> ELU -> L2 -> ELU -> L3 ----
    h0, d0 = elu_and_grad(x)                                             # (1, Cin)
    a1 = jnp.dot(h0, w1, preferred_element_type=jnp.float32) + b1        # (1, Cm)
    h1, d1 = elu_and_grad(a1)
    a2 = jnp.dot(h1, w2, preferred_element_type=jnp.float32) + b2        # (1, Cm)
    h2, d2 = elu_and_grad(a2)
    fx = jnp.dot(h2, w3, preferred_element_type=jnp.float32) + b3        # (1, Cin)

    y_ref[0] = (x + fx).astype(y_ref.dtype)

    # ---- log-det: Hutchinson power series  sum_j (-1)^(j+1)/j * u J^j u ----
    # J = dF/dx = diag(d0) W1_t diag(d1) W2_t diag(d2) W3_t   (row-vector VJP:
    # v <- ((v @ W3_t) * d2 @ W2_t) * d1 @ W1_t) * d0 ), where W*_t = W*.T is
    # exactly the torch weight layout -> passed in pre-transposed.
    v = u                                                                # (n, Cin)
    tr = jnp.zeros((u.shape[0], 1), jnp.float32)                         # (n, 1)
    for j in range(1, k + 1):                                            # k static, unrolled
        g2 = jnp.dot(v, w3t, preferred_element_type=jnp.float32) * d2    # (n, Cm)
        g1 = jnp.dot(g2, w2t, preferred_element_type=jnp.float32) * d1   # (n, Cm)
        v = jnp.dot(g1, w1t, preferred_element_type=jnp.float32) * d0    # (n, Cin)
        s = jnp.sum(v * u, axis=1, keepdims=True)                        # (n, 1)
        sign = 1.0 if (j % 2 == 1) else -1.0
        tr = tr + (sign / float(j)) * s
    ld_ref[0] = jnp.mean(tr, axis=0, keepdims=True)                      # (1, 1)


# ------------------------------- wrapper --------------------------------------


def invertible_resnet1d_forward(x, params, noise_key, *, k=5, n=10):
    """Forward pass of InvertibleResNet1d.

    x: (B, in_channels) float32.  Returns (x + residual(x), logdet) with shapes
    ((B, in_channels), (B,)).
    """
    B, cin = x.shape
    w1, b1 = params["w1"], params["b1"]
    w2, b2 = params["w2"], params["b2"]
    w3, b3 = params["w3"], params["b3"]
    # Transposed copies for the VJP chain (tiny; avoids in-kernel transposes).
    w1t, w2t, w3t = jnp.transpose(w1), jnp.transpose(w2), jnp.transpose(w3)

    # Hutchinson probes (torch.randn equivalent, drawn deterministically here).
    u = jax.random.normal(noise_key, (B, n, cin), jnp.float32)

    x3 = x[:, None, :]                                   # (B, 1, Cin)

    def per_b(shape):
        nd = len(shape)
        return pl.BlockSpec((1,) + tuple(shape[1:]),
                            lambda b, _nd=nd: (b,) + (0,) * (_nd - 1))

    def full(shape):
        nd = len(shape)
        return pl.BlockSpec(tuple(shape), lambda b, _nd=nd: (0,) * _nd)

    operands = (x3, u, w1, b1, w2, b2, w3, b3, w1t, w2t, w3t)
    in_specs = ([per_b(x3.shape), per_b(u.shape)]
                + [full(op.shape) for op in operands[2:]])

    y3, ld3 = pl.pallas_call(
        functools.partial(_iresnet_kernel, k=k),
        grid=(B,),
        in_specs=in_specs,
        out_specs=(per_b((B, 1, cin)), per_b((B, 1, 1))),
        out_shape=(jax.ShapeDtypeStruct((B, 1, cin), jnp.float32),
                   jax.ShapeDtypeStruct((B, 1, 1), jnp.float32)),
        compiler_params=pltpu.CompilerParams(
            dimension_semantics=("parallel",)),
    )(*operands)

    return y3[:, 0, :], ld3[:, 0, 0]


# ------------------- parameter init (synthetic weights) -----------------------


def _spectral_normalize(w, coeff=0.9, n_iter=30):
    """spectral_norm_fc semantics: W <- W * min(1, coeff / sigma(W))."""
    v = jnp.ones((w.shape[1],), jnp.float32) / jnp.sqrt(float(w.shape[1]))
    for _ in range(n_iter):
        uvec = w @ v
        uvec = uvec / (jnp.linalg.norm(uvec) + 1e-12)
        v = w.T @ uvec
        v = v / (jnp.linalg.norm(v) + 1e-12)
    sigma = jnp.linalg.norm(w @ v)
    scale = jnp.minimum(1.0, coeff / (sigma + 1e-12))
    return w * scale


def init_params(key, in_channels, interm_channels, coeff=0.9):
    ks = jax.random.split(key, 3)

    def lin(kk, fan_in, fan_out):
        kw, kb = jax.random.split(kk)
        w = jax.random.normal(kw, (fan_in, fan_out), jnp.float32) / jnp.sqrt(float(fan_in))
        b = jax.random.normal(kb, (1, fan_out), jnp.float32) * 0.05
        return _spectral_normalize(w, coeff), b

    w1, b1 = lin(ks[0], in_channels, interm_channels)
    w2, b2 = lin(ks[1], interm_channels, interm_channels)
    w3, b3 = lin(ks[2], interm_channels, in_channels)
    return dict(w1=w1, b1=b1, w2=w2, b2=b2, w3=w3, b3=b3)


# ----------------------- pure-JAX reference (for checking) --------------------


def _reference_forward(x, u, params, *, k=5):
    w1, b1 = params["w1"], params["b1"]
    w2, b2 = params["w2"], params["b2"]
    w3, b3 = params["w3"], params["b3"]

    def elu(a):
        return jnp.where(a > 0, a, jnp.exp(jnp.minimum(a, 0.0)) - 1.0)

    def delu(a):
        return jnp.where(a > 0, 1.0, jnp.exp(jnp.minimum(a, 0.0)))

    h0 = elu(x)
    a1 = h0 @ w1 + b1
    h1 = elu(a1)
    a2 = h1 @ w2 + b2
    h2 = elu(a2)
    fx = h2 @ w3 + b3
    y = x + fx

    d0, d1, d2 = delu(x), delu(a1), delu(a2)
    v = u
    B, n, _ = u.shape
    tr = jnp.zeros((B, n), jnp.float32)
    for j in range(1, k + 1):
        g2 = jnp.einsum('bni,mi->bnm', v, w3) * d2[:, None, :]
        g1 = jnp.einsum('bnm,km->bnk', g2, w2) * d1[:, None, :]
        v = jnp.einsum('bnk,ik->bni', g1, w1) * d0[:, None, :]
        s = jnp.sum(v * u, axis=-1)
        tr = tr + ((-1.0) ** (j + 1) / float(j)) * s
    return y, jnp.mean(tr, axis=1)


# ----------------------------------- main --------------------------------------


if __name__ == "__main__":
    key = jax.random.PRNGKey(0)
    k_x, k_p, k_n = jax.random.split(key, 3)

    B, in_channels, interm_channels = 2, 4, 32
    k_terms, n_probes = 5, 10                     # as in forward(): trace(..., 5, 10)

    x = jax.random.normal(k_x, (B, in_channels), jnp.float32)
    params = init_params(k_p, in_channels, interm_channels, coeff=0.9)

    y, logdet = invertible_resnet1d_forward(x, params, k_n, k=k_terms, n=n_probes)
    y = jax.block_until_ready(y)
    logdet = jax.block_until_ready(logdet)

    assert y.shape == (B, in_channels), y.shape
    assert logdet.shape == (B,), logdet.shape
    assert bool(jnp.all(jnp.isfinite(y))) and bool(jnp.all(jnp.isfinite(logdet)))

    # cross-check against a pure-JAX reference with the *same* probe noise
    u_ref = jax.random.normal(k_n, (B, n_probes, in_channels), jnp.float32)
    y_ref, ld_ref = _reference_forward(x, u_ref, params, k=k_terms)
    assert bool(jnp.allclose(y, y_ref, rtol=5e-2, atol=5e-2))
    assert bool(jnp.allclose(logdet, ld_ref, rtol=5e-2, atol=5e-2))

    print("KERNEL_OK")
</pallas_src>

<mosaic_0001>
module attributes {stable_mosaic.version = 11 : i64} {
  func.func @_iresnet_kernel(%arg0: i32, %arg1: memref<1x1x4xf32, #tpu.memory_space<vmem>>, %arg2: memref<1x10x4xf32, #tpu.memory_space<vmem>>, %arg3: memref<4x32xf32, #tpu.memory_space<vmem>>, %arg4: memref<1x32xf32, #tpu.memory_space<vmem>>, %arg5: memref<32x32xf32, #tpu.memory_space<vmem>>, %arg6: memref<1x32xf32, #tpu.memory_space<vmem>>, %arg7: memref<32x4xf32, #tpu.memory_space<vmem>>, %arg8: memref<1x4xf32, #tpu.memory_space<vmem>>, %arg9: memref<32x4xf32, #tpu.memory_space<vmem>>, %arg10: memref<32x32xf32, #tpu.memory_space<vmem>>, %arg11: memref<4x32xf32, #tpu.memory_space<vmem>>, %arg12: memref<1x1x4xf32, #tpu.memory_space<vmem>>, %arg13: memref<1x1x1xf32, #tpu.memory_space<vmem>>) attributes {dimension_semantics = [#tpu.dimension_semantics<parallel>], iteration_bounds = array<i64: 2>, scalar_prefetch = 0 : i64, scratch_operands = 0 : i64, tpu.core_type = #tpu.core_type<tc>, window_params = [{transform_indices = @transform_0, window_bounds = array<i64: 1, 1, 4>}, {transform_indices = @transform_1, window_bounds = array<i64: 1, 10, 4>}, {pipeline_mode = #tpu.pipeline_mode<synchronous>, transform_indices = @transform_2, window_bounds = array<i64: 4, 32>}, {pipeline_mode = #tpu.pipeline_mode<synchronous>, transform_indices = @transform_3, window_bounds = array<i64: 1, 32>}, {pipeline_mode = #tpu.pipeline_mode<synchronous>, transform_indices = @transform_4, window_bounds = array<i64: 32, 32>}, {pipeline_mode = #tpu.pipeline_mode<synchronous>, transform_indices = @transform_5, window_bounds = array<i64: 1, 32>}, {pipeline_mode = #tpu.pipeline_mode<synchronous>, transform_indices = @transform_6, window_bounds = array<i64: 32, 4>}, {pipeline_mode = #tpu.pipeline_mode<synchronous>, transform_indices = @transform_7, window_bounds = array<i64: 1, 4>}, {pipeline_mode = #tpu.pipeline_mode<synchronous>, transform_indices = @transform_8, window_bounds = array<i64: 32, 4>}, {pipeline_mode = #tpu.pipeline_mode<synchronous>, transform_indices = @transform_9, window_bounds = array<i64: 32, 32>}, {pipeline_mode = #tpu.pipeline_mode<synchronous>, transform_indices = @transform_10, window_bounds = array<i64: 4, 32>}, {transform_indices = @transform_11, window_bounds = array<i64: 1, 1, 4>}, {transform_indices = @transform_12, window_bounds = array<i64: 1, 1, 1>}]} {
    %c0 = arith.constant 0 : index
    %c0_0 = arith.constant 0 : index
    %c0_1 = arith.constant 0 : index
    %0 = vector.load %arg1[%c0, %c0_0, %c0_1] : memref<1x1x4xf32, #tpu.memory_space<vmem>>, vector<1x1x4xf32>
    %1 = vector.shape_cast %0 : vector<1x1x4xf32> to vector<1x4xf32>
    %c0_2 = arith.constant 0 : index
    %c0_3 = arith.constant 0 : index
    %c0_4 = arith.constant 0 : index
    %2 = vector.load %arg2[%c0_2, %c0_3, %c0_4] : memref<1x10x4xf32, #tpu.memory_space<vmem>>, vector<1x10x4xf32>
    %3 = vector.shape_cast %2 : vector<1x10x4xf32> to vector<10x4xf32>
    %c0_5 = arith.constant 0 : index
    %c0_6 = arith.constant 0 : index
    %4 = vector.load %arg3[%c0_5, %c0_6] : memref<4x32xf32, #tpu.memory_space<vmem>>, vector<4x32xf32>
    %c0_7 = arith.constant 0 : index
    %c0_8 = arith.constant 0 : index
    %5 = vector.load %arg5[%c0_7, %c0_8] : memref<32x32xf32, #tpu.memory_space<vmem>>, vector<32x32xf32>
    %c0_9 = arith.constant 0 : index
    %c0_10 = arith.constant 0 : index
    %6 = vector.load %arg7[%c0_9, %c0_10] : memref<32x4xf32, #tpu.memory_space<vmem>>, vector<32x4xf32>
    %c0_11 = arith.constant 0 : index
    %c0_12 = arith.constant 0 : index
    %7 = vector.load %arg4[%c0_11, %c0_12] : memref<1x32xf32, #tpu.memory_space<vmem>>, vector<1x32xf32>
    %c0_13 = arith.constant 0 : index
    %c0_14 = arith.constant 0 : index
    %8 = vector.load %arg6[%c0_13, %c0_14] : memref<1x32xf32, #tpu.memory_space<vmem>>, vector<1x32xf32>
    %c0_15 = arith.constant 0 : index
    %c0_16 = arith.constant 0 : index
    %9 = vector.load %arg8[%c0_15, %c0_16] : memref<1x4xf32, #tpu.memory_space<vmem>>, vector<1x4xf32>
    %c0_17 = arith.constant 0 : index
    %c0_18 = arith.constant 0 : index
    %10 = vector.load %arg9[%c0_17, %c0_18] : memref<32x4xf32, #tpu.memory_space<vmem>>, vector<32x4xf32>
    %c0_19 = arith.constant 0 : index
    %c0_20 = arith.constant 0 : index
    %11 = vector.load %arg10[%c0_19, %c0_20] : memref<32x32xf32, #tpu.memory_space<vmem>>, vector<32x32xf32>
    %c0_21 = arith.constant 0 : index
    %c0_22 = arith.constant 0 : index
    %12 = vector.load %arg11[%c0_21, %c0_22] : memref<4x32xf32, #tpu.memory_space<vmem>>, vector<4x32xf32>
    %cst = arith.constant 0.000000e+00 : f32
    %13 = vector.broadcast %cst : f32 to vector<1x4xf32>
    %14 = arith.minimumf %1, %13 : vector<1x4xf32>
    %15 = math.exp %14 : vector<1x4xf32>
    %cst_23 = arith.constant 0.000000e+00 : f32
    %16 = vector.broadcast %cst_23 : f32 to vector<1x4xf32>
    %17 = arith.cmpf ogt, %1, %16 : vector<1x4xf32>
    %cst_24 = arith.constant 1.000000e+00 : f32
    %18 = vector.broadcast %cst_24 : f32 to vector<1x4xf32>
    %19 = arith.subf %15, %18 : vector<1x4xf32>
    %20 = arith.select %17, %1, %19 : vector<1x4xi1>, vector<1x4xf32>
    %cst_25 = arith.constant 0.000000e+00 : f32
    %21 = vector.broadcast %cst_25 : f32 to vector<1x4xf32>
    %22 = arith.cmpf ogt, %1, %21 : vector<1x4xf32>
    %cst_26 = arith.constant 1.000000e+00 : f32
    %23 = vector.broadcast %cst_26 : f32 to vector<1x4xf32>
    %24 = arith.select %22, %23, %15 : vector<1x4xi1>, vector<1x4xf32>
    %cst_27 = arith.constant dense<0.000000e+00> : vector<1x32xf32>
    %25 = tpu.matmul %20, %4, %cst_27 {dimension_numbers = #tpu.dot_dimension_numbers<[1], [0], [0], [1], [0, 0, 1, 1], [], []>} : vector<1x4xf32>, vector<4x32xf32>, vector<1x32xf32> -> vector<1x32xf32>
    %26 = arith.addf %25, %7 : vector<1x32xf32>
    %cst_28 = arith.constant 0.000000e+00 : f32
    %27 = vector.broadcast %cst_28 : f32 to vector<1x32xf32>
    %28 = arith.minimumf %26, %27 : vector<1x32xf32>
    %29 = math.exp %28 : vector<1x32xf32>
    %cst_29 = arith.constant 0.000000e+00 : f32
    %30 = vector.broadcast %cst_29 : f32 to vector<1x32xf32>
    %31 = arith.cmpf ogt, %26, %30 : vector<1x32xf32>
    %cst_30 = arith.constant 1.000000e+00 : f32
    %32 = vector.broadcast %cst_30 : f32 to vector<1x32xf32>
    %33 = arith.subf %29, %32 : vector<1x32xf32>
    %34 = arith.select %31, %26, %33 : vector<1x32xi1>, vector<1x32xf32>
    %cst_31 = arith.constant 0.000000e+00 : f32
    %35 = vector.broadcast %cst_31 : f32 to vector<1x32xf32>
    %36 = arith.cmpf ogt, %26, %35 : vector<1x32xf32>
    %cst_32 = arith.constant 1.000000e+00 : f32
    %37 = vector.broadcast %cst_32 : f32 to vector<1x32xf32>
    %38 = arith.select %36, %37, %29 : vector<1x32xi1>, vector<1x32xf32>
    %cst_33 = arith.constant dense<0.000000e+00> : vector<1x32xf32>
    %39 = tpu.matmul %34, %5, %cst_33 {dimension_numbers = #tpu.dot_dimension_numbers<[1], [0], [0], [1], [0, 0, 1, 1], [], []>} : vector<1x32xf32>, vector<32x32xf32>, vector<1x32xf32> -> vector<1x32xf32>
    %40 = arith.addf %39, %8 : vector<1x32xf32>
    %cst_34 = arith.constant 0.000000e+00 : f32
    %41 = vector.broadcast %cst_34 : f32 to vector<1x32xf32>
    %42 = arith.minimumf %40, %41 : vector<1x32xf32>
    %43 = math.exp %42 : vector<1x32xf32>
    %cst_35 = arith.constant 0.000000e+00 : f32
    %44 = vector.broadcast %cst_35 : f32 to vector<1x32xf32>
    %45 = arith.cmpf ogt, %40, %44 : vector<1x32xf32>
    %cst_36 = arith.constant 1.000000e+00 : f32
    %46 = vector.broadcast %cst_36 : f32 to vector<1x32xf32>
    %47 = arith.subf %43, %46 : vector<1x32xf32>
    %48 = arith.select %45, %40, %47 : vector<1x32xi1>, vector<1x32xf32>
    %cst_37 = arith.constant 0.000000e+00 : f32
    %49 = vector.broadcast %cst_37 : f32 to vector<1x32xf32>
    %50 = arith.cmpf ogt, %40, %49 : vector<1x32xf32>
    %cst_38 = arith.constant 1.000000e+00 : f32
    %51 = vector.broadcast %cst_38 : f32 to vector<1x32xf32>
    %52 = arith.select %50, %51, %43 : vector<1x32xi1>, vector<1x32xf32>
    %cst_39 = arith.constant dense<0.000000e+00> : vector<1x4xf32>
    %53 = tpu.matmul %48, %6, %cst_39 {dimension_numbers = #tpu.dot_dimension_numbers<[1], [0], [0], [1], [0, 0, 1, 1], [], []>} : vector<1x32xf32>, vector<32x4xf32>, vector<1x4xf32> -> vector<1x4xf32>
    %54 = arith.addf %53, %9 : vector<1x4xf32>
    %55 = arith.addf %1, %54 : vector<1x4xf32>
    %c0_40 = arith.constant 0 : index
    %c0_41 = arith.constant 0 : index
    %c0_42 = arith.constant 0 : index
    %56 = vector.load %arg12[%c0_40, %c0_41, %c0_42] : memref<1x1x4xf32, #tpu.memory_space<vmem>>, vector<1x1x4xf32>
    %57 = vector.shape_cast %56 : vector<1x1x4xf32> to vector<1x4xf32>
    %58 = vector.shape_cast %55 : vector<1x4xf32> to vector<1x1x4xf32>
    tpu.vector_store %arg12[%c0_40, %c0_41, %c0_42], %58 {strides = array<i32>} : memref<1x1x4xf32, #tpu.memory_space<vmem>>, vector<1x1x4xf32>,
    %cst_43 = arith.constant 0.000000e+00 : f32
    %59 = vector.broadcast %cst_43 : f32 to vector<10x1xf32>
    %cst_44 = arith.constant dense<0.000000e+00> : vector<10x32xf32>
    %60 = tpu.matmul %3, %12, %cst_44 {dimension_numbers = #tpu.dot_dimension_numbers<[1], [0], [0], [1], [0, 0, 1, 1], [], []>} : vector<10x4xf32>, vector<4x32xf32>, vector<10x32xf32> -> vector<10x32xf32>
    %61 = vector.broadcast %52 : vector<1x32xf32> to vector<10x32xf32>
    %62 = arith.mulf %60, %61 : vector<10x32xf32>
    %cst_45 = arith.constant dense<0.000000e+00> : vector<10x32xf32>
    %63 = tpu.matmul %62, %11, %cst_45 {dimension_numbers = #tpu.dot_dimension_numbers<[1], [0], [0], [1], [0, 0, 1, 1], [], []>} : vector<10x32xf32>, vector<32x32xf32>, vector<10x32xf32> -> vector<10x32xf32>
    %64 = vector.broadcast %38 : vector<1x32xf32> to vector<10x32xf32>
    %65 = arith.mulf %63, %64 : vector<10x32xf32>
    %cst_46 = arith.constant dense<0.000000e+00> : vector<10x4xf32>
    %66 = tpu.matmul %65, %10, %cst_46 {dimension_numbers = #tpu.dot_dimension_numbers<[1], [0], [0], [1], [0, 0, 1, 1], [], []>} : vector<10x32xf32>, vector<32x4xf32>, vector<10x4xf32> -> vector<10x4xf32>
    %67 = vector.broadcast %24 : vector<1x4xf32> to vector<10x4xf32>
    %68 = arith.mulf %66, %67 : vector<10x4xf32>
    %69 = arith.mulf %68, %3 : vector<10x4xf32>
    %cst_47 = arith.constant dense<0.000000e+00> : vector<10xf32>
    %70 = vector.multi_reduction <add>, %69, %cst_47 [1] : vector<10x4xf32> to vector<10xf32>
    %71 = vector.shape_cast %70 : vector<10xf32> to vector<10x1xf32>
    %cst_48 = arith.constant 1.000000e+00 : f32
    %72 = vector.broadcast %cst_48 : f32 to vector<10x1xf32>
    %73 = arith.mulf %72, %71 : vector<10x1xf32>
    %74 = arith.addf %59, %73 : vector<10x1xf32>
    %cst_49 = arith.constant dense<0.000000e+00> : vector<10x32xf32>
    %75 = tpu.matmul %68, %12, %cst_49 {dimension_numbers = #tpu.dot_dimension_numbers<[1], [0], [0], [1], [0, 0, 1, 1], [], []>} : vector<10x4xf32>, vector<4x32xf32>, vector<10x32xf32> -> vector<10x32xf32>
    %76 = vector.broadcast %52 : vector<1x32xf32> to vector<10x32xf32>
    %77 = arith.mulf %75, %76 : vector<10x32xf32>
    %cst_50 = arith.constant dense<0.000000e+00> : vector<10x32xf32>
    %78 = tpu.matmul %77, %11, %cst_50 {dimension_numbers = #tpu.dot_dimension_numbers<[1], [0], [0], [1], [0, 0, 1, 1], [], []>} : vector<10x32xf32>, vector<32x32xf32>, vector<10x32xf32> -> vector<10x32xf32>
    %79 = vector.broadcast %38 : vector<1x32xf32> to vector<10x32xf32>
    %80 = arith.mulf %78, %79 : vector<10x32xf32>
    %cst_51 = arith.constant dense<0.000000e+00> : vector<10x4xf32>
    %81 = tpu.matmul %80, %10, %cst_51 {dimension_numbers = #tpu.dot_dimension_numbers<[1], [0], [0], [1], [0, 0, 1, 1], [], []>} : vector<10x32xf32>, vector<32x4xf32>, vector<10x4xf32> -> vector<10x4xf32>
    %82 = vector.broadcast %24 : vector<1x4xf32> to vector<10x4xf32>
    %83 = arith.mulf %81, %82 : vector<10x4xf32>
    %84 = arith.mulf %83, %3 : vector<10x4xf32>
    %cst_52 = arith.constant dense<0.000000e+00> : vector<10xf32>
    %85 = vector.multi_reduction <add>, %84, %cst_52 [1] : vector<10x4xf32> to vector<10xf32>
    %86 = vector.shape_cast %85 : vector<10xf32> to vector<10x1xf32>
    %cst_53 = arith.constant -5.000000e-01 : f32
    %87 = vector.broadcast %cst_53 : f32 to vector<10x1xf32>
    %88 = arith.mulf %87, %86 : vector<10x1xf32>
    %89 = arith.addf %74, %88 : vector<10x1xf32>
    %cst_54 = arith.constant dense<0.000000e+00> : vector<10x32xf32>
    %90 = tpu.matmul %83, %12, %cst_54 {dimension_numbers = #tpu.dot_dimension_numbers<[1], [0], [0], [1], [0, 0, 1, 1], [], []>} : vector<10x4xf32>, vector<4x32xf32>, vector<10x32xf32> -> vector<10x32xf32>
    %91 = vector.broadcast %52 : vector<1x32xf32> to vector<10x32xf32>
    %92 = arith.mulf %90, %91 : vector<10x32xf32>
    %cst_55 = arith.constant dense<0.000000e+00> : vector<10x32xf32>
    %93 = tpu.matmul %92, %11, %cst_55 {dimension_numbers = #tpu.dot_dimension_numbers<[1], [0], [0], [1], [0, 0, 1, 1], [], []>} : vector<10x32xf32>, vector<32x32xf32>, vector<10x32xf32> -> vector<10x32xf32>
    %94 = vector.broadcast %38 : vector<1x32xf32> to vector<10x32xf32>
    %95 = arith.mulf %93, %94 : vector<10x32xf32>
    %cst_56 = arith.constant dense<0.000000e+00> : vector<10x4xf32>
    %96 = tpu.matmul %95, %10, %cst_56 {dimension_numbers = #tpu.dot_dimension_numbers<[1], [0], [0], [1], [0, 0, 1, 1], [], []>} : vector<10x32xf32>, vector<32x4xf32>, vector<10x4xf32> -> vector<10x4xf32>
    %97 = vector.broadcast %24 : vector<1x4xf32> to vector<10x4xf32>
    %98 = arith.mulf %96, %97 : vector<10x4xf32>
    %99 = arith.mulf %98, %3 : vector<10x4xf32>
    %cst_57 = arith.constant dense<0.000000e+00> : vector<10xf32>
    %100 = vector.multi_reduction <add>, %99, %cst_57 [1] : vector<10x4xf32> to vector<10xf32>
    %101 = vector.shape_cast %100 : vector<10xf32> to vector<10x1xf32>
    %cst_58 = arith.constant 0.333333343 : f32
    %102 = vector.broadcast %cst_58 : f32 to vector<10x1xf32>
    %103 = arith.mulf %102, %101 : vector<10x1xf32>
    %104 = arith.addf %89, %103 : vector<10x1xf32>
    %cst_59 = arith.constant dense<0.000000e+00> : vector<10x32xf32>
    %105 = tpu.matmul %98, %12, %cst_59 {dimension_numbers = #tpu.dot_dimension_numbers<[1], [0], [0], [1], [0, 0, 1, 1], [], []>} : vector<10x4xf32>, vector<4x32xf32>, vector<10x32xf32> -> vector<10x32xf32>
    %106 = vector.broadcast %52 : vector<1x32xf32> to vector<10x32xf32>
    %107 = arith.mulf %105, %106 : vector<10x32xf32>
    %cst_60 = arith.constant dense<0.000000e+00> : vector<10x32xf32>
    %108 = tpu.matmul %107, %11, %cst_60 {dimension_numbers = #tpu.dot_dimension_numbers<[1], [0], [0], [1], [0, 0, 1, 1], [], []>} : vector<10x32xf32>, vector<32x32xf32>, vector<10x32xf32> -> vector<10x32xf32>
    %109 = vector.broadcast %38 : vector<1x32xf32> to vector<10x32xf32>
    %110 = arith.mulf %108, %109 : vector<10x32xf32>
    %cst_61 = arith.constant dense<0.000000e+00> : vector<10x4xf32>
    %111 = tpu.matmul %110, %10, %cst_61 {dimension_numbers = #tpu.dot_dimension_numbers<[1], [0], [0], [1], [0, 0, 1, 1], [], []>} : vector<10x32xf32>, vector<32x4xf32>, vector<10x4xf32> -> vector<10x4xf32>
    %112 = vector.broadcast %24 : vector<1x4xf32> to vector<10x4xf32>
    %113 = arith.mulf %111, %112 : vector<10x4xf32>
    %114 = arith.mulf %113, %3 : vector<10x4xf32>
    %cst_62 = arith.constant dense<0.000000e+00> : vector<10xf32>
    %115 = vector.multi_reduction <add>, %114, %cst_62 [1] : vector<10x4xf32> to vector<10xf32>
    %116 = vector.shape_cast %115 : vector<10xf32> to vector<10x1xf32>
    %cst_63 = arith.constant -2.500000e-01 : f32
    %117 = vector.broadcast %cst_63 : f32 to vector<10x1xf32>
    %118 = arith.mulf %117, %116 : vector<10x1xf32>
    %119 = arith.addf %104, %118 : vector<10x1xf32>
    %cst_64 = arith.constant dense<0.000000e+00> : vector<10x32xf32>
    %120 = tpu.matmul %113, %12, %cst_64 {dimension_numbers = #tpu.dot_dimension_numbers<[1], [0], [0], [1], [0, 0, 1, 1], [], []>} : vector<10x4xf32>, vector<4x32xf32>, vector<10x32xf32> -> vector<10x32xf32>
    %121 = vector.broadcast %52 : vector<1x32xf32> to vector<10x32xf32>
    %122 = arith.mulf %120, %121 : vector<10x32xf32>
    %cst_65 = arith.constant dense<0.000000e+00> : vector<10x32xf32>
    %123 = tpu.matmul %122, %11, %cst_65 {dimension_numbers = #tpu.dot_dimension_numbers<[1], [0], [0], [1], [0, 0, 1, 1], [], []>} : vector<10x32xf32>, vector<32x32xf32>, vector<10x32xf32> -> vector<10x32xf32>
    %124 = vector.broadcast %38 : vector<1x32xf32> to vector<10x32xf32>
    %125 = arith.mulf %123, %124 : vector<10x32xf32>
    %cst_66 = arith.constant dense<0.000000e+00> : vector<10x4xf32>
    %126 = tpu.matmul %125, %10, %cst_66 {dimension_numbers = #tpu.dot_dimension_numbers<[1], [0], [0], [1], [0, 0, 1, 1], [], []>} : vector<10x32xf32>, vector<32x4xf32>, vector<10x4xf32> -> vector<10x4xf32>
    %127 = vector.broadcast %24 : vector<1x4xf32> to vector<10x4xf32>
    %128 = arith.mulf %126, %127 : vector<10x4xf32>
    %129 = arith.mulf %128, %3 : vector<10x4xf32>
    %cst_67 = arith.constant dense<0.000000e+00> : vector<10xf32>
    %130 = vector.multi_reduction <add>, %129, %cst_67 [1] : vector<10x4xf32> to vector<10xf32>
    %131 = vector.shape_cast %130 : vector<10xf32> to vector<10x1xf32>
    %cst_68 = arith.constant 2.000000e-01 : f32
    %132 = vector.broadcast %cst_68 : f32 to vector<10x1xf32>
    %133 = arith.mulf %132, %131 : vector<10x1xf32>
    %134 = arith.addf %119, %133 : vector<10x1xf32>
    %cst_69 = arith.constant dense<0.000000e+00> : vector<1xf32>
    %135 = vector.multi_reduction <add>, %134, %cst_69 [0] : vector<10x1xf32> to vector<1xf32>
    %136 = vector.shape_cast %135 : vector<1xf32> to vector<1x1xf32>
    %cst_70 = arith.constant 1.000000e+01 : f32
    %137 = vector.broadcast %cst_70 : f32 to vector<1x1xf32>
    %138 = arith.divf %136, %137 : vector<1x1xf32>
    %c0_71 = arith.constant 0 : index
    %c0_72 = arith.constant 0 : index
    %c0_73 = arith.constant 0 : index
    %139 = vector.load %arg13[%c0_71, %c0_72, %c0_73] : memref<1x1x1xf32, #tpu.memory_space<vmem>>, vector<1x1x1xf32>
    %140 = vector.shape_cast %139 : vector<1x1x1xf32> to vector<1x1xf32>
    %141 = vector.shape_cast %138 : vector<1x1xf32> to vector<1x1x1xf32>
    tpu.vector_store %arg13[%c0_71, %c0_72, %c0_73], %141 {strides = array<i32>} : memref<1x1x1xf32, #tpu.memory_space<vmem>>, vector<1x1x1xf32>,
    return
  }
  func.func @transform_0(%arg0: i32) -> (i32, i32, i32) {
    %c0_i32 = arith.constant 0 : i32
    %c0_i32_0 = arith.constant 0 : i32
    %c0_i32_1 = arith.constant 0 : i32
    return %arg0, %c0_i32, %c0_i32_0 : i32, i32, i32
  }
  func.func @transform_1(%arg0: i32) -> (i32, i32, i32) {
    %c0_i32 = arith.constant 0 : i32
    %c0_i32_0 = arith.constant 0 : i32
    %c0_i32_1 = arith.constant 0 : i32
    return %arg0, %c0_i32, %c0_i32_0 : i32, i32, i32
  }
  func.func @transform_2(%arg0: i32) -> (i32, i32) {
    %c0_i32 = arith.constant 0 : i32
    %c0_i32_0 = arith.constant 0 : i32
    %c0_i32_1 = arith.constant 0 : i32
    return %c0_i32, %c0_i32_0 : i32, i32
  }
  func.func @transform_3(%arg0: i32) -> (i32, i32) {
    %c0_i32 = arith.constant 0 : i32
    %c0_i32_0 = arith.constant 0 : i32
    %c0_i32_1 = arith.constant 0 : i32
    return %c0_i32, %c0_i32_0 : i32, i32
  }
  func.func @transform_4(%arg0: i32) -> (i32, i32) {
    %c0_i32 = arith.constant 0 : i32
    %c0_i32_0 = arith.constant 0 : i32
    %c0_i32_1 = arith.constant 0 : i32
    return %c0_i32, %c0_i32_0 : i32, i32
  }
  func.func @transform_5(%arg0: i32) -> (i32, i32) {
    %c0_i32 = arith.constant 0 : i32
    %c0_i32_0 = arith.constant 0 : i32
    %c0_i32_1 = arith.constant 0 : i32
    return %c0_i32, %c0_i32_0 : i32, i32
  }
  func.func @transform_6(%arg0: i32) -> (i32, i32) {
    %c0_i32 = arith.constant 0 : i32
    %c0_i32_0 = arith.constant 0 : i32
    %c0_i32_1 = arith.constant 0 : i32
    return %c0_i32, %c0_i32_0 : i32, i32
  }
  func.func @transform_7(%arg0: i32) -> (i32, i32) {
    %c0_i32 = arith.constant 0 : i32
    %c0_i32_0 = arith.constant 0 : i32
    %c0_i32_1 = arith.constant 0 : i32
    return %c0_i32, %c0_i32_0 : i32, i32
  }
  func.func @transform_8(%arg0: i32) -> (i32, i32) {
    %c0_i32 = arith.constant 0 : i32
    %c0_i32_0 = arith.constant 0 : i32
    %c0_i32_1 = arith.constant 0 : i32
    return %c0_i32, %c0_i32_0 : i32, i32
  }
  func.func @transform_9(%arg0: i32) -> (i32, i32) {
    %c0_i32 = arith.constant 0 : i32
    %c0_i32_0 = arith.constant 0 : i32
    %c0_i32_1 = arith.constant 0 : i32
    return %c0_i32, %c0_i32_0 : i32, i32
  }
  func.func @transform_10(%arg0: i32) -> (i32, i32) {
    %c0_i32 = arith.constant 0 : i32
    %c0_i32_0 = arith.constant 0 : i32
    %c0_i32_1 = arith.constant 0 : i32
    return %c0_i32, %c0_i32_0 : i32, i32
  }
  func.func @transform_11(%arg0: i32) -> (i32, i32, i32) {
    %c0_i32 = arith.constant 0 : i32
    %c0_i32_0 = arith.constant 0 : i32
    %c0_i32_1 = arith.constant 0 : i32
    return %arg0, %c0_i32, %c0_i32_0 : i32, i32, i32
  }
  func.func @transform_12(%arg0: i32) -> (i32, i32, i32) {
    %c0_i32 = arith.constant 0 : i32
    %c0_i32_0 = arith.constant 0 : i32
    %c0_i32_1 = arith.constant 0 : i32
    return %arg0, %c0_i32, %c0_i32_0 : i32, i32, i32
  }
}

</mosaic_0001>

<llo_original>
// kernel: tpu_custom_call.1
$region0: #{tpu_custom_call.1}
  #allocation0 [shape = 'u32[]', space=smem, size = 0x4, offset = 0x4, fixed_abs, tag = 'smem constant byte address 0x4 - core index']
  #allocation1 [shape = 'u32[144,128]{1,0:T(1,128)}', space=vmem, size = 0x12000, scoped, tag = 'internal scratch']
  %s0 = inlined_call_operand.vmem [shape: f32[2,1,4], index: 0, kind: input, shape index: {}]
  %s1 = inlined_call_operand.vmem [shape: f32[2,10,4], index: 1, kind: input, shape index: {}]
  %s2 = inlined_call_operand.vmem [shape: f32[4,32], index: 2, kind: input, shape index: {}]
  %s3 = inlined_call_operand.vmem [shape: f32[1,32], index: 3, kind: input, shape index: {}]
  %s4 = inlined_call_operand.vmem [shape: f32[32,32], index: 4, kind: input, shape index: {}]
  %s5 = inlined_call_operand.vmem [shape: f32[1,32], index: 5, kind: input, shape index: {}]
  %s6 = inlined_call_operand.vmem [shape: f32[32,4], index: 6, kind: input, shape index: {}]
  %s7 = inlined_call_operand.vmem [shape: f32[1,4], index: 7, kind: input, shape index: {}]
  %s8 = inlined_call_operand.vmem [shape: f32[32,4], index: 8, kind: input, shape index: {}]
  %s9 = inlined_call_operand.vmem [shape: f32[32,32], index: 9, kind: input, shape index: {}]
  %s10 = inlined_call_operand.vmem [shape: f32[4,32], index: 10, kind: input, shape index: {}]
  %s11 = inlined_call_operand.hbm [shape: f32[2,1,4], index: 11, kind: output, shape index: {0}]
  %s12 = inlined_call_operand.vmem [shape: f32[2,1,1], index: 12, kind: output, shape index: {1}]
  %13 = xla_tuple %s11, %s12
  %s14 = sld [smem:[#allocation0]]
  $region85: #{tpu_custom_call.1} parent=0
    _
  %s16 = ssub.s32 1, %s14
  %s17 = scalar_select 0, %s16, %s14
  $region1: #{tpu_custom_call.1} parent=0
    #allocation2 [shape = 'u8[1024]{0}', space=vmem, size = 0x400, scoped, tag = 'output window, operand 0']
    #allocation3 [shape = 's32[2]{0}', space=sflag, size = 0x8, scoped, tag = 'scoped memory for tpu_custom_call.1']
    %18 = vsyncpa [#allocation3], 0
    %s19 = scalar_lea.sflag [#allocation3], 1
    %20 = vsyncpa %s19, 0
    loop: start=0, step=1, limit=4
    $region2: #{tpu_custom_call.1} parent=1 // loop_pre_header
      _
    $region3: #{tpu_custom_call.1} parent=1 // loop_header
      %s22 = sphi 0, %s26
      %p23 = scmp.ge.s32.totalorder %s22, 4
      %s32 = sphi 0, %s34
      %s35 = sphi 0, %s32
      %s36 = sphi 0, %s35
      %s52 = sphi 0, %s36
      %s58 = sphi 0, %s60
      %s61 = sphi 0, %s58
      %s62 = sphi 0, %s61
      %s78 = sphi 0, %s62
      %s82 = sphi 0, %s82
      %s84 = sphi 0, %s82
      %s85 = sphi 0, %s84
      %s99 = sphi 0, %s85
      %s103 = sphi 0, %s103
      %s105 = sphi 0, %s103
      %s106 = sphi 0, %s105
      %s120 = sphi 0, %s106
      %s124 = sphi 0, %s124
      %s126 = sphi 0, %s124
      %s127 = sphi 0, %s126
      %s141 = sphi 0, %s127
      %s145 = sphi 0, %s145
      %s147 = sphi 0, %s145
      %s148 = sphi 0, %s147
      %s162 = sphi 0, %s148
      %s166 = sphi 0, %s166
      %s168 = sphi 0, %s166
      %s169 = sphi 0, %s168
      %s183 = sphi 0, %s169
      %s187 = sphi 0, %s187
      %s189 = sphi 0, %s187
      %s190 = sphi 0, %s189
      %s204 = sphi 0, %s190
      %s208 = sphi 0, %s208
      %s210 = sphi 0, %s208
      %s211 = sphi 0, %s210
      %s225 = sphi 0, %s211
      %s229 = sphi 0, %s229
      %s231 = sphi 0, %s229
      %s232 = sphi 0, %s231
      %s246 = sphi 0, %s232
      %s250 = sphi 0, %s250
      %s252 = sphi 0, %s250
      %s253 = sphi 0, %s252
      %s267 = sphi 0, %s253
      %s273 = sphi 0, %s275
      %s276 = sphi 0, %s273
      %s277 = sphi 0, %s276
      %s293 = sphi 0, %s277
      %s299 = sphi 0, %s301
      %s302 = sphi 0, %s299
      %s303 = sphi 0, %s302
      %s319 = sphi 0, %s303
    $region4: #{tpu_custom_call.1} parent=1 // loop_header_branch
      %25 = sbr.rel (%p23) target = $region8
    $region5: #{tpu_custom_call.1} parent=1 // loop_body
      %s27 = ssub.s32 %s22, 1
      %s28 = ssub.s32 %s22, 2
      %s29 = sadd.s32 %s22, 1
      %s30 = ssub.s32 %s22, %s29
      %p31 = scmp.eq.s32.totalorder %s30, 0
      %s33 = sadd.s32 %s32, 1
      %s34 = scalar_select %p31, %s32, %s33
      %p37 = pneg %p31
      %p38 = scmp.eq.s32.totalorder %s22, 1
      %p39 = por %p37, %p38
      %p40 = scmp.ne.s32.totalorder %s32, %s35
      %p41 = scmp.eq.s32.totalorder %s22, 0
      %p42 = por %p40, %p41
      %p43 = scmp.ne.s32.totalorder %s32, %s35
      %p44 = scmp.eq.s32.totalorder %s27, 1
      %p45 = por %p43, %p44
      %p46 = scmp.ne.s32.totalorder %s35, %s36
      %p47 = scmp.eq.s32.totalorder %s27, 0
      %p48 = por %p46, %p47
      %p49 = scmp.ne.s32.totalorder %s35, %s36
      %p50 = scmp.eq.s32.totalorder %s28, 1
      %p51 = por %p49, %p50
      %p53 = scmp.ne.s32.totalorder %s36, %s52
      %p54 = scmp.eq.s32.totalorder %s28, 0
      %p55 = por %p53, %p54
      %s56 = ssub.s32 %s22, %s29
      %p57 = scmp.eq.s32.totalorder %s56, 0
      %s59 = sadd.s32 %s58, 1
      %s60 = scalar_select %p57, %s58, %s59
      %p63 = pneg %p57
      %p64 = scmp.eq.s32.totalorder %s22, 1
      %p65 = por %p63, %p64
      %p66 = scmp.ne.s32.totalorder %s58, %s61
      %p67 = scmp.eq.s32.totalorder %s22, 0
      %p68 = por %p66, %p67
      %p69 = scmp.ne.s32.totalorder %s58, %s61
      %p70 = scmp.eq.s32.totalorder %s27, 1
      %p71 = por %p69, %p70
      %p72 = scmp.ne.s32.totalorder %s61, %s62
      %p73 = scmp.eq.s32.totalorder %s27, 0
      %p74 = por %p72, %p73
      %p75 = scmp.ne.s32.totalorder %s61, %s62
      %p76 = scmp.eq.s32.totalorder %s28, 1
      %p77 = por %p75, %p76
      %p79 = scmp.ne.s32.totalorder %s62, %s78
      %p80 = scmp.eq.s32.totalorder %s28, 0
      %p81 = por %p79, %p80
      %s83 = sadd.s32 %s82, 1
      %p86 = scmp.eq.s32.totalorder %s22, 1
      %p87 = scmp.ne.s32.totalorder %s82, %s84
      %p88 = scmp.eq.s32.totalorder %s22, 0
      %p89 = por %p87, %p88
      %p90 = scmp.ne.s32.totalorder %s82, %s84
      %p91 = scmp.eq.s32.totalorder %s27, 1
      %p92 = por %p90, %p91
      %p93 = scmp.ne.s32.totalorder %s84, %s85
      %p94 = scmp.eq.s32.totalorder %s27, 0
      %p95 = por %p93, %p94
      %p96 = scmp.ne.s32.totalorder %s84, %s85
      %p97 = scmp.eq.s32.totalorder %s28, 1
      %p98 = por %p96, %p97
      %p100 = scmp.ne.s32.totalorder %s85, %s99
      %p101 = scmp.eq.s32.totalorder %s28, 0
      %p102 = por %p100, %p101
      %s104 = sadd.s32 %s103, 1
      %p107 = scmp.eq.s32.totalorder %s22, 1
      %p108 = scmp.ne.s32.totalorder %s103, %s105
      %p109 = scmp.eq.s32.totalorder %s22, 0
      %p110 = por %p108, %p109
      %p111 = scmp.ne.s32.totalorder %s103, %s105
      %p112 = scmp.eq.s32.totalorder %s27, 1
      %p113 = por %p111, %p112
      %p114 = scmp.ne.s32.totalorder %s105, %s106
      %p115 = scmp.eq.s32.totalorder %s27, 0
      %p116 = por %p114, %p115
      %p117 = scmp.ne.s32.totalorder %s105, %s106
      %p118 = scmp.eq.s32.totalorder %s28, 1
      %p119 = por %p117, %p118
      %p121 = scmp.ne.s32.totalorder %s106, %s120
      %p122 = scmp.eq.s32.totalorder %s28, 0
      %p123 = por %p121, %p122
      %s125 = sadd.s32 %s124, 1
      %p128 = scmp.eq.s32.totalorder %s22, 1
      %p129 = scmp.ne.s32.totalorder %s124, %s126
      %p130 = scmp.eq.s32.totalorder %s22, 0
      %p131 = por %p129, %p130
      %p132 = scmp.ne.s32.totalorder %s124, %s126
      %p133 = scmp.eq.s32.totalorder %s27, 1
      %p134 = por %p132, %p133
      %p135 = scmp.ne.s32.totalorder %s126, %s127
      %p136 = scmp.eq.s32.totalorder %s27, 0
      %p137 = por %p135, %p136
      %p138 = scmp.ne.s32.totalorder %s126, %s127
      %p139 = scmp.eq.s32.totalorder %s28, 1
      %p140 = por %p138, %p139
      %p142 = scmp.ne.s32.totalorder %s127, %s141
      %p143 = scmp.eq.s32.totalorder %s28, 0
      %p144 = por %p142, %p143
      %s146 = sadd.s32 %s145, 1
      %p149 = scmp.eq.s32.totalorder %s22, 1
      %p150 = scmp.ne.s32.totalorder %s145, %s147
      %p151 = scmp.eq.s32.totalorder %s22, 0
      %p152 = por %p150, %p151
      %p153 = scmp.ne.s32.totalorder %s145, %s147
      %p154 = scmp.eq.s32.totalorder %s27, 1
      %p155 = por %p153, %p154
      %p156 = scmp.ne.s32.totalorder %s147, %s148
      %p157 = scmp.eq.s32.totalorder %s27, 0
      %p158 = por %p156, %p157
      %p159 = scmp.ne.s32.totalorder %s147, %s148
      %p160 = scmp.eq.s32.totalorder %s28, 1
      %p161 = por %p159, %p160
      %p163 = scmp.ne.s32.totalorder %s148, %s162
      %p164 = scmp.eq.s32.totalorder %s28, 0
      %p165 = por %p163, %p164
      %s167 = sadd.s32 %s166, 1
      %p170 = scmp.eq.s32.totalorder %s22, 1
      %p171 = scmp.ne.s32.totalorder %s166, %s168
      %p172 = scmp.eq.s32.totalorder %s22, 0
      %p173 = por %p171, %p172
      %p174 = scmp.ne.s32.totalorder %s166, %s168
      %p175 = scmp.eq.s32.totalorder %s27, 1
      %p176 = por %p174, %p175
      %p177 = scmp.ne.s32.totalorder %s168, %s169
      %p178 = scmp.eq.s32.totalorder %s27, 0
      %p179 = por %p177, %p178
      %p180 = scmp.ne.s32.totalorder %s168, %s169
      %p181 = scmp.eq.s32.totalorder %s28, 1
      %p182 = por %p180, %p181
      %p184 = scmp.ne.s32.totalorder %s169, %s183
      %p185 = scmp.eq.s32.totalorder %s28, 0
      %p186 = por %p184, %p185
      %s188 = sadd.s32 %s187, 1
      %p191 = scmp.eq.s32.totalorder %s22, 1
      %p192 = scmp.ne.s32.totalorder %s187, %s189
      %p193 = scmp.eq.s32.totalorder %s22, 0
      %p194 = por %p192, %p193
      %p195 = scmp.ne.s32.totalorder %s187, %s189
      %p196 = scmp.eq.s32.totalorder %s27, 1
      %p197 = por %p195, %p196
      %p198 = scmp.ne.s32.totalorder %s189, %s190
      %p199 = scmp.eq.s32.totalorder %s27, 0
      %p200 = por %p198, %p199
      %p201 = scmp.ne.s32.totalorder %s189, %s190
      %p202 = scmp.eq.s32.totalorder %s28, 1
      %p203 = por %p201, %p202
      %p205 = scmp.ne.s32.totalorder %s190, %s204
      %p206 = scmp.eq.s32.totalorder %s28, 0
      %p207 = por %p205, %p206
      %s209 = sadd.s32 %s208, 1
      %p212 = scmp.eq.s32.totalorder %s22, 1
      %p213 = scmp.ne.s32.totalorder %s208, %s210
      %p214 = scmp.eq.s32.totalorder %s22, 0
      %p215 = por %p213, %p214
      %p216 = scmp.ne.s32.totalorder %s208, %s210
      %p217 = scmp.eq.s32.totalorder %s27, 1
      %p218 = por %p216, %p217
      %p219 = scmp.ne.s32.totalorder %s210, %s211
      %p220 = scmp.eq.s32.totalorder %s27, 0
      %p221 = por %p219, %p220
      %p222 = scmp.ne.s32.totalorder %s210, %s211
      %p223 = scmp.eq.s32.totalorder %s28, 1
      %p224 = por %p222, %p223
      %p226 = scmp.ne.s32.totalorder %s211, %s225
      %p227 = scmp.eq.s32.totalorder %s28, 0
      %p228 = por %p226, %p227
      %s230 = sadd.s32 %s229, 1
      %p233 = scmp.eq.s32.totalorder %s22, 1
      %p234 = scmp.ne.s32.totalorder %s229, %s231
      %p235 = scmp.eq.s32.totalorder %s22, 0
      %p236 = por %p234, %p235
      %p237 = scmp.ne.s32.totalorder %s229, %s231
      %p238 = scmp.eq.s32.totalorder %s27, 1
      %p239 = por %p237, %p238
      %p240 = scmp.ne.s32.totalorder %s231, %s232
      %p241 = scmp.eq.s32.totalorder %s27, 0
      %p242 = por %p240, %p241
      %p243 = scmp.ne.s32.totalorder %s231, %s232
      %p244 = scmp.eq.s32.totalorder %s28, 1
      %p245 = por %p243, %p244
      %p247 = scmp.ne.s32.totalorder %s232, %s246
      %p248 = scmp.eq.s32.totalorder %s28, 0
      %p249 = por %p247, %p248
      %s251 = sadd.s32 %s250, 1
      %p254 = scmp.eq.s32.totalorder %s22, 1
      %p255 = scmp.ne.s32.totalorder %s250, %s252
      %p256 = scmp.eq.s32.totalorder %s22, 0
      %p257 = por %p255, %p256
      %p258 = scmp.ne.s32.totalorder %s250, %s252
      %p259 = scmp.eq.s32.totalorder %s27, 1
      %p260 = por %p258, %p259
      %p261 = scmp.ne.s32.totalorder %s252, %s253
      %p262 = scmp.eq.s32.totalorder %s27, 0
      %p263 = por %p261, %p262
      %p264 = scmp.ne.s32.totalorder %s252, %s253
      %p265 = scmp.eq.s32.totalorder %s28, 1
      %p266 = por %p264, %p265
      %p268 = scmp.ne.s32.totalorder %s253, %s267
      %p269 = scmp.eq.s32.totalorder %s28, 0
      %p270 = por %p268, %p269
      %s271 = ssub.s32 %s22, %s29
      %p272 = scmp.eq.s32.totalorder %s271, 0
      %s274 = sadd.s32 %s273, 1
      %s275 = scalar_select %p272, %s273, %s274
      %p278 = pneg %p272
      %p279 = scmp.eq.s32.totalorder %s22, 1
      %p280 = por %p278, %p279
      %p281 = scmp.ne.s32.totalorder %s273, %s276
      %p282 = scmp.eq.s32.totalorder %s22, 0
      %p283 = por %p281, %p282
      %p284 = scmp.ne.s32.totalorder %s273, %s276
      %p285 = scmp.eq.s32.totalorder %s27, 1
      %p286 = por %p284, %p285
      %p287 = scmp.ne.s32.totalorder %s276, %s277
      %p288 = scmp.eq.s32.totalorder %s27, 0
      %p289 = por %p287, %p288
      %p290 = scmp.ne.s32.totalorder %s276, %s277
      %p291 = scmp.eq.s32.totalorder %s28, 1
      %p292 = por %p290, %p291
      %p294 = scmp.ne.s32.totalorder %s277, %s293
      %p295 = scmp.eq.s32.totalorder %s28, 0
      %p296 = por %p294, %p295
      %s297 = ssub.s32 %s22, %s29
      %p298 = scmp.eq.s32.totalorder %s297, 0
      %s300 = sadd.s32 %s299, 1
      %s301 = scalar_select %p298, %s299, %s300
      %p304 = pneg %p298
      %p305 = scmp.eq.s32.totalorder %s22, 1
      %p306 = por %p304, %p305
      %p307 = scmp.ne.s32.totalorder %s299, %s302
      %p308 = scmp.eq.s32.totalorder %s22, 0
      %p309 = por %p307, %p308
      %p310 = scmp.ne.s32.totalorder %s299, %s302
      %p311 = scmp.eq.s32.totalorder %s27, 1
      %p312 = por %p310, %p311
      %p313 = scmp.ne.s32.totalorder %s302, %s303
      %p314 = scmp.eq.s32.totalorder %s27, 0
      %p315 = por %p313, %p314
      %p316 = scmp.ne.s32.totalorder %s302, %s303
      %p317 = scmp.eq.s32.totalorder %s28, 1
      %p318 = por %p316, %p317
      %p320 = scmp.ne.s32.totalorder %s303, %s319
      %p321 = scmp.eq.s32.totalorder %s28, 0
      %p322 = por %p320, %p321
      %p323 = scmp.le.s32.totalorder 1, %s22
      %p324 = scmp.lt.s32.totalorder %s22, 3
      %p325 = pnand %p323, %p324
      %p326 = pneg %p325
      // Predicated region
      $region9: #{tpu_custom_call.1} parent=5 // pred_check
        _
      $region10: #{tpu_custom_call.1} parent=5 // pred_check_branch
        %328 = sbr.rel (%p325) target = $region12
      $region11: #{tpu_custom_call.1} parent=5 // pred_region
        %s329 = ssub.s32 %s22, 1
        // Predicated region
        $region13: #{tpu_custom_call.1} parent=11 // pred_check
          %p330 = pneg %p95
        $region14: #{tpu_custom_call.1} parent=11 // pred_check_branch
          %332 = sbr.rel (%p330) target = $region16
        $region15: #{tpu_custom_call.1} parent=11 // pred_region
          _
        $region16: #{tpu_custom_call.1} parent=11 // pred_fallthru
          _
        // Predicated region
        $region17: #{tpu_custom_call.1} parent=11 // pred_check
          %p333 = pneg %p116
        $region18: #{tpu_custom_call.1} parent=11 // pred_check_branch
          %335 = sbr.rel (%p333) target = $region20
        $region19: #{tpu_custom_call.1} parent=11 // pred_region
          _
        $region20: #{tpu_custom_call.1} parent=11 // pred_fallthru
          _
        // Predicated region
        $region21: #{tpu_custom_call.1} parent=11 // pred_check
          %p336 = pneg %p137
        $region22: #{tpu_custom_call.1} parent=11 // pred_check_branch
          %338 = sbr.rel (%p336) target = $region24
        $region23: #{tpu_custom_call.1} parent=11 // pred_region
          _
        $region24: #{tpu_custom_call.1} parent=11 // pred_fallthru
          _
        // Predicated region
        $region25: #{tpu_custom_call.1} parent=11 // pred_check
          %p339 = pneg %p158
        $region26: #{tpu_custom_call.1} parent=11 // pred_check_branch
          %341 = sbr.rel (%p339) target = $region28
        $region27: #{tpu_custom_call.1} parent=11 // pred_region
          _
        $region28: #{tpu_custom_call.1} parent=11 // pred_fallthru
          _
        // Predicated region
        $region29: #{tpu_custom_call.1} parent=11 // pred_check
          %p342 = pneg %p179
        $region30: #{tpu_custom_call.1} parent=11 // pred_check_branch
          %344 = sbr.rel (%p342) target = $region32
        $region31: #{tpu_custom_call.1} parent=11 // pred_region
          _
        $region32: #{tpu_custom_call.1} parent=11 // pred_fallthru
          _
        // Predicated region
        $region33: #{tpu_custom_call.1} parent=11 // pred_check
          %p345 = pneg %p200
        $region34: #{tpu_custom_call.1} parent=11 // pred_check_branch
          %347 = sbr.rel (%p345) target = $region36
        $region35: #{tpu_custom_call.1} parent=11 // pred_region
          _
        $region36: #{tpu_custom_call.1} parent=11 // pred_fallthru
          _
        // Predicated region
        $region37: #{tpu_custom_call.1} parent=11 // pred_check
          %p348 = pneg %p221
        $region38: #{tpu_custom_call.1} parent=11 // pred_check_branch
          %350 = sbr.rel (%p348) target = $region40
        $region39: #{tpu_custom_call.1} parent=11 // pred_region
          _
        $region40: #{tpu_custom_call.1} parent=11 // pred_fallthru
          _
        // Predicated region
        $region41: #{tpu_custom_call.1} parent=11 // pred_check
          %p351 = pneg %p242
        $region42: #{tpu_custom_call.1} parent=11 // pred_check_branch
          %353 = sbr.rel (%p351) target = $region44
        $region43: #{tpu_custom_call.1} parent=11 // pred_region
          _
        $region44: #{tpu_custom_call.1} parent=11 // pred_fallthru
          _
        // Predicated region
        $region45: #{tpu_custom_call.1} parent=11 // pred_check
          %p354 = pneg %p263
        $region46: #{tpu_custom_call.1} parent=11 // pred_check_branch
          %356 = sbr.rel (%p354) target = $region48
        $region47: #{tpu_custom_call.1} parent=11 // pred_region
          _
        $region48: #{tpu_custom_call.1} parent=11 // pred_fallthru
          _
      $region12: #{tpu_custom_call.1} parent=5 // pred_fallthru
        _
      %p357 = scmp.lt.s32.totalorder %s22, 2
      // Predicated region
      $region49: #{tpu_custom_call.1} parent=5 // pred_check
        %p358 = pneg %p357
      $region50: #{tpu_custom_call.1} parent=5 // pred_check_branch
        %360 = sbr.rel (%p358) target = $region52
      $region51: #{tpu_custom_call.1} parent=5 // pred_region
        // Predicated region
        $region53: #{tpu_custom_call.1} parent=51 // pred_check
          %p361 = pneg %p42
        $region54: #{tpu_custom_call.1} parent=51 // pred_check_branch
          %363 = sbr.rel (%p361) target = $region56
        $region55: #{tpu_custom_call.1} parent=51 // pred_region
          %p364 = scmp.lt.s32.totalorder %s22, 1
          %s365 = scalar_select %p364, %s22, 1
          %s366 = scalar_lea.vmem %s0, %s365
        $region56: #{tpu_custom_call.1} parent=51 // pred_fallthru
          _
        // Predicated region
        $region57: #{tpu_custom_call.1} parent=51 // pred_check
          %p367 = pneg %p68
        $region58: #{tpu_custom_call.1} parent=51 // pred_check_branch
          %369 = sbr.rel (%p367) target = $region60
        $region59: #{tpu_custom_call.1} parent=51 // pred_region
          %p370 = scmp.lt.s32.totalorder %s22, 1
          %s371 = scalar_select %p370, %s22, 1
          %s372 = smul.addr %s371, 2
          %s373 = smul.addr %s372, 8
          %s374 = scalar_lea.vmem %s1, %s373
        $region60: #{tpu_custom_call.1} parent=51 // pred_fallthru
          _
      $region52: #{tpu_custom_call.1} parent=5 // pred_fallthru
        _
      %p375 = scmp.le.s32.totalorder 1, %s22
      %p376 = scmp.lt.s32.totalorder %s22, 3
      %p377 = pnand %p375, %p376
      %p378 = pneg %p377
      // Predicated region
      $region61: #{tpu_custom_call.1} parent=5 // pred_check
        _
      $region62: #{tpu_custom_call.1} parent=5 // pred_check_branch
        %380 = sbr.rel (%p377) target = $region64
      $region63: #{tpu_custom_call.1} parent=5 // pred_region
        %s381 = ssub.s32 %s22, 1
        %p382 = scmp.lt.s32.totalorder %s27, 1
        %s383 = scalar_select %p382, %s27, 1
        %s384 = scalar_lea.vmem %s0, %s383
        %p385 = pneg %p48
        %p386 = pneg %p45
        %p387 = scmp.lt.s32.totalorder %s27, 1
        %s388 = scalar_select %p387, %s27, 1
        %s389 = smul.addr %s388, 2
        %s390 = smul.addr %s389, 8
        %s391 = scalar_lea.vmem %s1, %s390
        %p392 = pneg %p74
        %p393 = pneg %p71
        %p394 = pneg %p95
        %p395 = pneg %p92
        %p396 = pneg %p116
        %p397 = pneg %p113
        %p398 = pneg %p137
        %p399 = pneg %p134
        %p400 = pneg %p158
        %p401 = pneg %p155
        %p402 = pneg %p179
        %p403 = pneg %p176
        %p404 = pneg %p200
        %p405 = pneg %p197
        %p406 = pneg %p221
        %p407 = pneg %p218
        %p408 = pneg %p242
        %p409 = pneg %p239
        %p410 = pneg %p263
        %p411 = pneg %p260
        %p412 = pneg %p289
        %p413 = pneg %p286
        %s414 = sand.u32 %s276, 1
        %s415 = scalar_lea.sflag [#allocation3], %s414
        %s416 = sand.u32 %s276, 1
        %s417 = scalar_lea.vmem [#allocation2], %s416
        %p418 = pneg %p315
        %p419 = pneg %p312
        %p420 = scmp.lt.s32.totalorder %s27, 1
        %s421 = scalar_select %p420, %s27, 1
        %s422 = scalar_lea.vmem %s12, %s421
        %p423 = scmp.lt.s32.totalorder %s27, 1
        %s424 = scalar_select %p423, %s27, 1
        %s425 = scalar_lea.vmem %s0, %s424
        %p426 = scmp.lt.s32.totalorder %s27, 1
        %s427 = scalar_select %p426, %s27, 1
        %s428 = smul.addr %s427, 2
        %s429 = smul.addr %s428, 8
        %s430 = scalar_lea.vmem %s1, %s429
        %p431 = scmp.lt.s32.totalorder %s27, 1
        %s432 = scalar_select %p431, %s27, 1
        %s433 = scalar_lea.vmem %s12, %s432
        %v434 = vld [vmem:[%s425] sm:$0x1]
        %v435 = vld [vmem:[%s430] sm:$0xff]
        %v436 = vld [vmem:[%s430 + $0x8] sm:$0x3]
        %v437 = vld [vmem:[%s2] sm:$0xf]
        %v438 = vld [vmem:[%s4] sm:$0xff]
        %v439 = vld [vmem:[%s4 + $0x8] sm:$0xff]
        %v440 = vld [vmem:[%s4 + $0x10] sm:$0xff]
        %v441 = vld [vmem:[%s4 + $0x18] sm:$0xff]
        %v442 = vld [vmem:[%s6] sm:$0xff]
        %v443 = vld [vmem:[%s6 + $0x8] sm:$0xff]
        %v444 = vld [vmem:[%s6 + $0x10] sm:$0xff]
        %v445 = vld [vmem:[%s6 + $0x18] sm:$0xff]
        %v446 = vld [vmem:[%s3] sm:$0x1]
        %v447 = vld [vmem:[%s5] sm:$0x1]
        %v448 = vld [vmem:[%s7] sm:$0x1]
        %v449 = vld [vmem:[%s8] sm:$0xff]
        %v450 = vld [vmem:[%s8 + $0x8] sm:$0xff]
        %v451 = vld [vmem:[%s8 + $0x10] sm:$0xff]
        %v452 = vld [vmem:[%s8 + $0x18] sm:$0xff]
        %v453 = vld [vmem:[%s9] sm:$0xff]
        %v454 = vld [vmem:[%s9 + $0x8] sm:$0xff]
        %v455 = vld [vmem:[%s9 + $0x10] sm:$0xff]
        %v456 = vld [vmem:[%s9 + $0x18] sm:$0xff]
        %v457 = vld [vmem:[%s10] sm:$0xf]
        %v458 = vmin.f32 %v434, 0.0
        %v459 = vmul.f32 %v458, 1.442695
        %v460 = vpow.pop %v459
        %vm461 = vcmp.gt.f32.partialorder %v434, 0.0
        %v462 = vsub.f32 %v460, 1.0
        %v463 = vsel %vm461, %v434, %v462
        %v464 = vsel %vm461, 1.0, %v460
        %vm465 = vcmask 31744
        %v467 = vsel %vm465, %v463, 0
        %vm469 = vcmask 1043456
        %v471 = vsel %vm469, %v437, 0
        %473 = vmatprep.subr.mxu0 0.0
        %474 = vmatpush1.msra.mxu0 %v471
        %475 = vmatprep.subr.mxu0 0.0
        %476 = vmatpush1.msra.mxu0 0.0
        %477 = vmatprep.subr.mxu0 0.0
        %478 = vmatpush1.msra.mxu0 0.0
        %479 = vmatprep.subr.mxu0 0.0
        %480 = vmatpush1.msra.mxu0 0.0
        %481 = vmatprep.subr.mxu0 0.0
        %482 = vmatpush1.msra.mxu0 0.0
        %483 = vmatprep.subr.mxu0 0.0
        %484 = vmatpush1.msra.mxu0 0.0
        %485 = vmatprep.subr.mxu0 0.0
        %486 = vmatpush1.msra.mxu0 0.0
        %487 = vmatprep.subr.mxu0 0.0
        %488 = vmatpush1.msra.mxu0 0.0
        %489 = vmatprep.subr.mxu0 0.0
        %490 = vmatpush1.msra.mxu0 0.0
        %491 = vmatprep.subr.mxu0 0.0
        %492 = vmatpush1.msra.mxu0 0.0
        %493 = vmatprep.subr.mxu0 0.0
        %494 = vmatpush1.msra.mxu0 0.0
        %495 = vmatprep.subr.mxu0 0.0
        %496 = vmatpush1.msra.mxu0 0.0
        %497 = vmatprep.subr.mxu0 0.0
        %498 = vmatpush1.msra.mxu0 0.0
        %499 = vmatprep.subr.mxu0 0.0
        %500 = vmatpush1.msra.mxu0 0.0
        %501 = vmatprep.subr.mxu0 0.0
        %502 = vmatpush1.msra.mxu0 0.0
        %503 = vmatprep.subr.mxu0 0.0
        %504 = vmatpush1.msra.mxu0 0.0
        %505 = vmatprep.subr.mxu0 0.0
        %506 = vmatpush1.msra.mxu0 0.0
        %507 = vmatprep.subr.mxu0 0.0
        %508 = vmatpush1.msra.mxu0 0.0
        %509 = vmatprep.subr.mxu0 0.0
        %510 = vmatpush1.msra.mxu0 0.0
        %511 = vmatprep.subr.mxu0 0.0
        %512 = vmatpush1.msra.mxu0 0.0
        %513 = vmatprep.subr.mxu0 0.0
        %514 = vmatpush1.msra.mxu0 0.0
        %515 = vmatprep.subr.mxu0 0.0
        %516 = vmatpush1.msra.mxu0 0.0
        %517 = vmatprep.subr.mxu0 0.0
        %518 = vmatpush1.msra.mxu0 0.0
        %519 = vmatprep.subr.mxu0 0.0
        %520 = vmatpush1.msra.mxu0 0.0
        %521 = vmatprep.subr.mxu0 0.0
        %522 = vmatpush1.msra.mxu0 0.0
        %523 = vmatprep.subr.mxu0 0.0
        %524 = vmatpush1.msra.mxu0 0.0
        %525 = vmatprep.subr.mxu0 0.0
        %526 = vmatpush1.msra.mxu0 0.0
        %527 = vmatprep.subr.mxu0 0.0
        %528 = vmatpush1.msra.mxu0 0.0
        %529 = vmatprep.subr.mxu0 0.0
        %530 = vmatpush1.msra.mxu0 0.0
        %531 = vmatprep.subr.mxu0 0.0
        %532 = vmatpush1.msra.mxu0 0.0
        %533 = vmatprep.subr.mxu0 0.0
        %534 = vmatpush1.msra.mxu0 0.0
        %535 = vmatprep.subr.mxu0 0.0
        %536 = vmatpush1.msra.mxu0 0.0
        %537 = vmatprep.mubr.f32.mxu0 0.0
        %538 = vmatmul.mubr.f32.gmra.mrb[0].mxu0 %v467
        %v539 = vpop.f32.mrb[0].mxu0
        %v540 = vadd.f32 %v446, %v539
        %v541 = vpop.f32.mrb[0].mxu0
        %542 = vdwg.mxu0
        %v543 = vmin.f32 %v540, 0.0
        %v544 = vmul.f32 %v543, 1.442695
        %v545 = vpow.pop %v544
        %vm546 = vcmp.gt.f32.partialorder %v540, 0.0
        %v547 = vsub.f32 %v545, 1.0
        %v548 = vsel %vm546, %v540, %v547
        %v549 = vsel %vm546, 1.0, %v545
        %vm550 = vcmask 261120
        %v552 = vsel %vm550, %v548, 0
        %554 = vmatprep.subr.mxu0 0.0
        %555 = vmatpush1.msra.mxu0 %v438
        %556 = vmatprep.subr.mxu0 0.0
        %557 = vmatpush1.msra.mxu0 %v439
        %558 = vmatprep.subr.mxu0 0.0
        %559 = vmatpush1.msra.mxu0 %v440
        %560 = vmatprep.subr.mxu0 0.0
        %561 = vmatpush1.msra.mxu0 %v441
        %562 = vmatprep.subr.mxu0 0.0
        %563 = vmatpush1.msra.mxu0 0.0
        %564 = vmatprep.subr.mxu0 0.0
        %565 = vmatpush1.msra.mxu0 0.0
        %566 = vmatprep.subr.mxu0 0.0
        %567 = vmatpush1.msra.mxu0 0.0
        %568 = vmatprep.subr.mxu0 0.0
        %569 = vmatpush1.msra.mxu0 0.0
        %570 = vmatprep.subr.mxu0 0.0
        %571 = vmatpush1.msra.mxu0 0.0
        %572 = vmatprep.subr.mxu0 0.0
        %573 = vmatpush1.msra.mxu0 0.0
        %574 = vmatprep.subr.mxu0 0.0
        %575 = vmatpush1.msra.mxu0 0.0
        %576 = vmatprep.subr.mxu0 0.0
        %577 = vmatpush1.msra.mxu0 0.0
        %578 = vmatprep.subr.mxu0 0.0
        %579 = vmatpush1.msra.mxu0 0.0
        %580 = vmatprep.subr.mxu0 0.0
        %581 = vmatpush1.msra.mxu0 0.0
        %582 = vmatprep.subr.mxu0 0.0
        %583 = vmatpush1.msra.mxu0 0.0
        %584 = vmatprep.subr.mxu0 0.0
        %585 = vmatpush1.msra.mxu0 0.0
        %586 = vmatprep.subr.mxu0 0.0
        %587 = vmatpush1.msra.mxu0 0.0
        %588 = vmatprep.subr.mxu0 0.0
        %589 = vmatpush1.msra.mxu0 0.0
        %590 = vmatprep.subr.mxu0 0.0
        %591 = vmatpush1.msra.mxu0 0.0
        %592 = vmatprep.subr.mxu0 0.0
        %593 = vmatpush1.msra.mxu0 0.0
        %594 = vmatprep.subr.mxu0 0.0
        %595 = vmatpush1.msra.mxu0 0.0
        %596 = vmatprep.subr.mxu0 0.0
        %597 = vmatpush1.msra.mxu0 0.0
        %598 = vmatprep.subr.mxu0 0.0
        %599 = vmatpush1.msra.mxu0 0.0
        %600 = vmatprep.subr.mxu0 0.0
        %601 = vmatpush1.msra.mxu0 0.0
        %602 = vmatprep.subr.mxu0 0.0
        %603 = vmatpush1.msra.mxu0 0.0
        %604 = vmatprep.subr.mxu0 0.0
        %605 = vmatpush1.msra.mxu0 0.0
        %606 = vmatprep.subr.mxu0 0.0
        %607 = vmatpush1.msra.mxu0 0.0
        %608 = vmatprep.subr.mxu0 0.0
        %609 = vmatpush1.msra.mxu0 0.0
        %610 = vmatprep.subr.mxu0 0.0
        %611 = vmatpush1.msra.mxu0 0.0
        %612 = vmatprep.subr.mxu0 0.0
        %613 = vmatpush1.msra.mxu0 0.0
        %614 = vmatprep.subr.mxu0 0.0
        %615 = vmatpush1.msra.mxu0 0.0
        %616 = vmatprep.subr.mxu0 0.0
        %617 = vmatpush1.msra.mxu0 0.0
        %618 = vmatprep.mubr.f32.mxu0 0.0
        %619 = vmatmul.mubr.f32.gmra.mrb[0].mxu0 %v552
        %v620 = vpop.f32.mrb[0].mxu0
        %v621 = vadd.f32 %v447, %v620
        %v622 = vpop.f32.mrb[0].mxu0
        %623 = vdwg.mxu0
        %v624 = vmin.f32 %v621, 0.0
        %v625 = vmul.f32 %v624, 1.442695
        %v626 = vpow.pop %v625
        %vm627 = vcmp.gt.f32.partialorder %v621, 0.0
        %v628 = vsub.f32 %v626, 1.0
        %v629 = vsel %vm627, %v621, %v628
        %v630 = vsel %vm627, 1.0, %v626
        %v632 = vsel %vm550, %v629, 0
        %634 = vmatprep.subr.mxu0 0.0
        %635 = vmatpush1.msra.mxu0 %v442
        %636 = vmatprep.subr.mxu0 0.0
        %637 = vmatpush1.msra.mxu0 %v443
        %638 = vmatprep.subr.mxu0 0.0
        %639 = vmatpush1.msra.mxu0 %v444
        %640 = vmatprep.subr.mxu0 0.0
        %641 = vmatpush1.msra.mxu0 %v445
        %642 = vmatprep.subr.mxu0 0.0
        %643 = vmatpush1.msra.mxu0 0.0
        %644 = vmatprep.subr.mxu0 0.0
        %645 = vmatpush1.msra.mxu0 0.0
        %646 = vmatprep.subr.mxu0 0.0
        %647 = vmatpush1.msra.mxu0 0.0
        %648 = vmatprep.subr.mxu0 0.0
        %649 = vmatpush1.msra.mxu0 0.0
        %650 = vmatprep.subr.mxu0 0.0
        %651 = vmatpush1.msra.mxu0 0.0
        %652 = vmatprep.subr.mxu0 0.0
        %653 = vmatpush1.msra.mxu0 0.0
        %654 = vmatprep.subr.mxu0 0.0
        %655 = vmatpush1.msra.mxu0 0.0
        %656 = vmatprep.subr.mxu0 0.0
        %657 = vmatpush1.msra.mxu0 0.0
        %658 = vmatprep.subr.mxu0 0.0
        %659 = vmatpush1.msra.mxu0 0.0
        %660 = vmatprep.subr.mxu0 0.0
        %661 = vmatpush1.msra.mxu0 0.0
        %662 = vmatprep.subr.mxu0 0.0
        %663 = vmatpush1.msra.mxu0 0.0
        %664 = vmatprep.subr.mxu0 0.0
        %665 = vmatpush1.msra.mxu0 0.0
        %666 = vmatprep.subr.mxu0 0.0
        %667 = vmatpush1.msra.mxu0 0.0
        %668 = vmatprep.subr.mxu0 0.0
        %669 = vmatpush1.msra.mxu0 0.0
        %670 = vmatprep.subr.mxu0 0.0
        %671 = vmatpush1.msra.mxu0 0.0
        %672 = vmatprep.subr.mxu0 0.0
        %673 = vmatpush1.msra.mxu0 0.0
        %674 = vmatprep.subr.mxu0 0.0
        %675 = vmatpush1.msra.mxu0 0.0
        %676 = vmatprep.subr.mxu0 0.0
        %677 = vmatpush1.msra.mxu0 0.0
        %678 = vmatprep.subr.mxu0 0.0
        %679 = vmatpush1.msra.mxu0 0.0
        %680 = vmatprep.subr.mxu0 0.0
        %681 = vmatpush1.msra.mxu0 0.0
        %682 = vmatprep.subr.mxu0 0.0
        %683 = vmatpush1.msra.mxu0 0.0
        %684 = vmatprep.subr.mxu0 0.0
        %685 = vmatpush1.msra.mxu0 0.0
        %686 = vmatprep.subr.mxu0 0.0
        %687 = vmatpush1.msra.mxu0 0.0
        %688 = vmatprep.subr.mxu0 0.0
        %689 = vmatpush1.msra.mxu0 0.0
        %690 = vmatprep.subr.mxu0 0.0
        %691 = vmatpush1.msra.mxu0 0.0
        %692 = vmatprep.subr.mxu0 0.0
        %693 = vmatpush1.msra.mxu0 0.0
        %694 = vmatprep.subr.mxu0 0.0
        %695 = vmatpush1.msra.mxu0 0.0
        %696 = vmatprep.subr.mxu0 0.0
        %697 = vmatpush1.msra.mxu0 0.0
        %698 = vmatprep.mubr.f32.mxu0 0.0
        %699 = vmatmul.mubr.f32.gmra.mrb[0].mxu0 %v632
        %v700 = vpop.f32.mrb[0].mxu0
        %v701 = vadd.f32 %v448, %v700
        %v702 = vpop.f32.mrb[0].mxu0
        %703 = vdwg.mxu0
        %v704 = vadd.f32 %v434, %v701
        %vm705 = vcmask 24576
        %706 = vst.msk [vmem:[%s417] sm:$0x1] %vm705, %v704
        %v708 = vsel %vm465, %v435, 0
        %v711 = vsel %vm465, %v436, 0
        %v714 = vsel %vm469, %v457, 0
        %716 = vmatprep.subr.mxu0 0.0
        %717 = vmatpush1.msra.mxu0 %v714
        %718 = vmatprep.subr.mxu0 0.0
        %719 = vmatpush1.msra.mxu0 0.0
        %720 = vmatprep.subr.mxu0 0.0
        %721 = vmatpush1.msra.mxu0 0.0
        %722 = vmatprep.subr.mxu0 0.0
        %723 = vmatpush1.msra.mxu0 0.0
        %724 = vmatprep.subr.mxu0 0.0
        %725 = vmatpush1.msra.mxu0 0.0
        %726 = vmatprep.subr.mxu0 0.0
        %727 = vmatpush1.msra.mxu0 0.0
        %728 = vmatprep.subr.mxu0 0.0
        %729 = vmatpush1.msra.mxu0 0.0
        %730 = vmatprep.subr.mxu0 0.0
        %731 = vmatpush1.msra.mxu0 0.0
        %732 = vmatprep.subr.mxu0 0.0
        %733 = vmatpush1.msra.mxu0 0.0
        %734 = vmatprep.subr.mxu0 0.0
        %735 = vmatpush1.msra.mxu0 0.0
        %736 = vmatprep.subr.mxu0 0.0
        %737 = vmatpush1.msra.mxu0 0.0
        %738 = vmatprep.subr.mxu0 0.0
        %739 = vmatpush1.msra.mxu0 0.0
        %740 = vmatprep.subr.mxu0 0.0
        %741 = vmatpush1.msra.mxu0 0.0
        %742 = vmatprep.subr.mxu0 0.0
        %743 = vmatpush1.msra.mxu0 0.0
        %744 = vmatprep.subr.mxu0 0.0
        %745 = vmatpush1.msra.mxu0 0.0
        %746 = vmatprep.subr.mxu0 0.0
        %747 = vmatpush1.msra.mxu0 0.0
        %748 = vmatprep.subr.mxu0 0.0
        %749 = vmatpush1.msra.mxu0 0.0
        %750 = vmatprep.subr.mxu0 0.0
        %751 = vmatpush1.msra.mxu0 0.0
        %752 = vmatprep.subr.mxu0 0.0
        %753 = vmatpush1.msra.mxu0 0.0
        %754 = vmatprep.subr.mxu0 0.0
        %755 = vmatpush1.msra.mxu0 0.0
        %756 = vmatprep.subr.mxu0 0.0
        %757 = vmatpush1.msra.mxu0 0.0
        %758 = vmatprep.subr.mxu0 0.0
        %759 = vmatpush1.msra.mxu0 0.0
        %760 = vmatprep.subr.mxu0 0.0
        %761 = vmatpush1.msra.mxu0 0.0
        %762 = vmatprep.subr.mxu0 0.0
        %763 = vmatpush1.msra.mxu0 0.0
        %764 = vmatprep.subr.mxu0 0.0
        %765 = vmatpush1.msra.mxu0 0.0
        %766 = vmatprep.subr.mxu0 0.0
        %767 = vmatpush1.msra.mxu0 0.0
        %768 = vmatprep.subr.mxu0 0.0
        %769 = vmatpush1.msra.mxu0 0.0
        %770 = vmatprep.subr.mxu0 0.0
        %771 = vmatpush1.msra.mxu0 0.0
        %772 = vmatprep.subr.mxu0 0.0
        %773 = vmatpush1.msra.mxu0 0.0
        %774 = vmatprep.subr.mxu0 0.0
        %775 = vmatpush1.msra.mxu0 0.0
        %776 = vmatprep.subr.mxu0 0.0
        %777 = vmatpush1.msra.mxu0 0.0
        %778 = vmatprep.subr.mxu0 0.0
        %779 = vmatpush1.msra.mxu0 0.0
        %780 = vmatprep.mubr.f32.mxu0 0.0
        %781 = vmatmul.mubr.f32.gmra.mrb[0].mxu0 %v708
        %v782 = vpop.f32.mrb[0].mxu0
        %v783 = vadd.f32 0.0, %v782
        %v784 = vpop.f32.mrb[0].mxu0
        %785 = vmatprep.mubr.f32.mxu0 0.0
        %786 = vmatmul.mubr.f32.gmra.mrb[0].mxu0 %v711
        %v787 = vpop.f32.mrb[0].mxu0
        %v788 = vadd.f32 0.0, %v787
        %v789 = vpop.f32.mrb[0].mxu0
        %790 = vdwg.mxu0
        %v791 = vlaneseq
        %v792 = vshrl.u32 %v791, 7
        %v793 = vsub.s32 0, %v792
        %v794 = vrot.slane %v630, %v793
        %v795 = vmul.f32 %v783, %v794
        %v796 = vmul.f32 %v788, %v794
        %v798 = vsel %vm550, %v795, 0
        %v801 = vsel %vm550, %v796, 0
        %803 = vmatprep.subr.mxu0 0.0
        %804 = vmatpush1.msra.mxu0 %v453
        %805 = vmatprep.subr.mxu0 0.0
        %806 = vmatpush1.msra.mxu0 %v454
        %807 = vmatprep.subr.mxu0 0.0
        %808 = vmatpush1.msra.mxu0 %v455
        %809 = vmatprep.subr.mxu0 0.0
        %810 = vmatpush1.msra.mxu0 %v456
        %811 = vmatprep.subr.mxu0 0.0
        %812 = vmatpush1.msra.mxu0 0.0
        %813 = vmatprep.subr.mxu0 0.0
        %814 = vmatpush1.msra.mxu0 0.0
        %815 = vmatprep.subr.mxu0 0.0
        %816 = vmatpush1.msra.mxu0 0.0
        %817 = vmatprep.subr.mxu0 0.0
        %818 = vmatpush1.msra.mxu0 0.0
        %819 = vmatprep.subr.mxu0 0.0
        %820 = vmatpush1.msra.mxu0 0.0
        %821 = vmatprep.subr.mxu0 0.0
        %822 = vmatpush1.msra.mxu0 0.0
        %823 = vmatprep.subr.mxu0 0.0
        %824 = vmatpush1.msra.mxu0 0.0
        %825 = vmatprep.subr.mxu0 0.0
        %826 = vmatpush1.msra.mxu0 0.0
        %827 = vmatprep.subr.mxu0 0.0
        %828 = vmatpush1.msra.mxu0 0.0
        %829 = vmatprep.subr.mxu0 0.0
        %830 = vmatpush1.msra.mxu0 0.0
        %831 = vmatprep.subr.mxu0 0.0
        %832 = vmatpush1.msra.mxu0 0.0
        %833 = vmatprep.subr.mxu0 0.0
        %834 = vmatpush1.msra.mxu0 0.0
        %835 = vmatprep.subr.mxu0 0.0
        %836 = vmatpush1.msra.mxu0 0.0
        %837 = vmatprep.subr.mxu0 0.0
        %838 = vmatpush1.msra.mxu0 0.0
        %839 = vmatprep.subr.mxu0 0.0
        %840 = vmatpush1.msra.mxu0 0.0
        %841 = vmatprep.subr.mxu0 0.0
        %842 = vmatpush1.msra.mxu0 0.0
        %843 = vmatprep.subr.mxu0 0.0
        %844 = vmatpush1.msra.mxu0 0.0
        %845 = vmatprep.subr.mxu0 0.0
        %846 = vmatpush1.msra.mxu0 0.0
        %847 = vmatprep.subr.mxu0 0.0
        %848 = vmatpush1.msra.mxu0 0.0
        %849 = vmatprep.subr.mxu0 0.0
        %850 = vmatpush1.msra.mxu0 0.0
        %851 = vmatprep.subr.mxu0 0.0
        %852 = vmatpush1.msra.mxu0 0.0
        %853 = vmatprep.subr.mxu0 0.0
        %854 = vmatpush1.msra.mxu0 0.0
        %855 = vmatprep.subr.mxu0 0.0
        %856 = vmatpush1.msra.mxu0 0.0
        %857 = vmatprep.subr.mxu0 0.0
        %858 = vmatpush1.msra.mxu0 0.0
        %859 = vmatprep.subr.mxu0 0.0
        %860 = vmatpush1.msra.mxu0 0.0
        %861 = vmatprep.subr.mxu0 0.0
        %862 = vmatpush1.msra.mxu0 0.0
        %863 = vmatprep.subr.mxu0 0.0
        %864 = vmatpush1.msra.mxu0 0.0
        %865 = vmatprep.subr.mxu0 0.0
        %866 = vmatpush1.msra.mxu0 0.0
        %867 = vmatprep.mubr.f32.mxu0 0.0
        %868 = vmatmul.mubr.f32.gmra.mrb[0].mxu0 %v798
        %v869 = vpop.f32.mrb[0].mxu0
        %v870 = vadd.f32 0.0, %v869
        %v871 = vpop.f32.mrb[0].mxu0
        %872 = vmatprep.mubr.f32.mxu0 0.0
        %873 = vmatmul.mubr.f32.gmra.mrb[0].mxu0 %v801
        %v874 = vpop.f32.mrb[0].mxu0
        %v875 = vadd.f32 0.0, %v874
        %v876 = vpop.f32.mrb[0].mxu0
        %877 = vdwg.mxu0
        %v878 = vlaneseq
        %v879 = vshrl.u32 %v878, 7
        %v880 = vsub.s32 0, %v879
        %v881 = vrot.slane %v549, %v880
        %v882 = vmul.f32 %v870, %v881
        %v883 = vmul.f32 %v875, %v881
        %v885 = vsel %vm550, %v882, 0
        %v888 = vsel %vm550, %v883, 0
        %890 = vmatprep.subr.mxu0 0.0
        %891 = vmatpush1.msra.mxu0 %v449
        %892 = vmatprep.subr.mxu0 0.0
        %893 = vmatpush1.msra.mxu0 %v450
        %894 = vmatprep.subr.mxu0 0.0
        %895 = vmatpush1.msra.mxu0 %v451
        %896 = vmatprep.subr.mxu0 0.0
        %897 = vmatpush1.msra.mxu0 %v452
        %898 = vmatprep.subr.mxu0 0.0
        %899 = vmatpush1.msra.mxu0 0.0
        %900 = vmatprep.subr.mxu0 0.0
        %901 = vmatpush1.msra.mxu0 0.0
        %902 = vmatprep.subr.mxu0 0.0
        %903 = vmatpush1.msra.mxu0 0.0
        %904 = vmatprep.subr.mxu0 0.0
        %905 = vmatpush1.msra.mxu0 0.0
        %906 = vmatprep.subr.mxu0 0.0
        %907 = vmatpush1.msra.mxu0 0.0
        %908 = vmatprep.subr.mxu0 0.0
        %909 = vmatpush1.msra.mxu0 0.0
        %910 = vmatprep.subr.mxu0 0.0
        %911 = vmatpush1.msra.mxu0 0.0
        %912 = vmatprep.subr.mxu0 0.0
        %913 = vmatpush1.msra.mxu0 0.0
        %914 = vmatprep.subr.mxu0 0.0
        %915 = vmatpush1.msra.mxu0 0.0
        %916 = vmatprep.subr.mxu0 0.0
        %917 = vmatpush1.msra.mxu0 0.0
        %918 = vmatprep.subr.mxu0 0.0
        %919 = vmatpush1.msra.mxu0 0.0
        %920 = vmatprep.subr.mxu0 0.0
        %921 = vmatpush1.msra.mxu0 0.0
        %922 = vmatprep.subr.mxu0 0.0
        %923 = vmatpush1.msra.mxu0 0.0
        %924 = vmatprep.subr.mxu0 0.0
        %925 = vmatpush1.msra.mxu0 0.0
        %926 = vmatprep.subr.mxu0 0.0
        %927 = vmatpush1.msra.mxu0 0.0
        %928 = vmatprep.subr.mxu0 0.0
        %929 = vmatpush1.msra.mxu0 0.0
        %930 = vmatprep.subr.mxu0 0.0
        %931 = vmatpush1.msra.mxu0 0.0
        %932 = vmatprep.subr.mxu0 0.0
        %933 = vmatpush1.msra.mxu0 0.0
        %934 = vmatprep.subr.mxu0 0.0
        %935 = vmatpush1.msra.mxu0 0.0
        %936 = vmatprep.subr.mxu0 0.0
        %937 = vmatpush1.msra.mxu0 0.0
        %938 = vmatprep.subr.mxu0 0.0
        %939 = vmatpush1.msra.mxu0 0.0
        %940 = vmatprep.subr.mxu0 0.0
        %941 = vmatpush1.msra.mxu0 0.0
        %942 = vmatprep.subr.mxu0 0.0
        %943 = vmatpush1.msra.mxu0 0.0
        %944 = vmatprep.subr.mxu0 0.0
        %945 = vmatpush1.msra.mxu0 0.0
        %946 = vmatprep.subr.mxu0 0.0
        %947 = vmatpush1.msra.mxu0 0.0
        %948 = vmatprep.subr.mxu0 0.0
        %949 = vmatpush1.msra.mxu0 0.0
        %950 = vmatprep.subr.mxu0 0.0
        %951 = vmatpush1.msra.mxu0 0.0
        %952 = vmatprep.subr.mxu0 0.0
        %953 = vmatpush1.msra.mxu0 0.0
        %954 = vmatprep.mubr.f32.mxu0 0.0
        %955 = vmatmul.mubr.f32.gmra.mrb[0].mxu0 %v885
        %v956 = vpop.f32.mrb[0].mxu0
        %v957 = vadd.f32 0.0, %v956
        %v958 = vpop.f32.mrb[0].mxu0
        %959 = vmatprep.mubr.f32.mxu0 0.0
        %960 = vmatmul.mubr.f32.gmra.mrb[0].mxu0 %v888
        %v961 = vpop.f32.mrb[0].mxu0
        %v962 = vadd.f32 0.0, %v961
        %v963 = vpop.f32.mrb[0].mxu0
        %964 = vdwg.mxu0
        %v966 = vlaneseq
        %v967 = vshrl.u32 %v966, 7
        %v968 = vsub.s32 0, %v967
        %v969 = vrot.slane %v464, %v968
        %v971 = vmul.f32 %v957, %v969
        %v972 = vmul.f32 %v962, %v969
        %v973 = vmul.f32 %v971, %v435
        %v974 = vmul.f32 %v972, %v436
        %v975 = vsel %vm465, %v973, 0.0
        %976 = vadd.xlane.f32.xlu0 %v975
        %v977 = vpop.xlane.xlu0 %976
        %vm978 = vcmask 25600
        %v979 = vsel %vm978, %v974, 0.0
        %980 = vadd.xlane.f32.xlu0 %v979
        %v981 = vpop.xlane.xlu0 %980
        %v982 = vadd.f32 %v977, 0.0
        %v983 = vadd.f32 %v981, 0.0
        %v985 = vsel %vm465, %v971, 0
        %v988 = vsel %vm465, %v972, 0
        %990 = vmatprep.subr.mxu0 0.0
        %991 = vmatpush1.msra.mxu0 %v714
        %992 = vmatprep.subr.mxu0 0.0
        %993 = vmatpush1.msra.mxu0 0.0
        %994 = vmatprep.subr.mxu0 0.0
        %995 = vmatpush1.msra.mxu0 0.0
        %996 = vmatprep.subr.mxu0 0.0
        %997 = vmatpush1.msra.mxu0 0.0
        %998 = vmatprep.subr.mxu0 0.0
        %999 = vmatpush1.msra.mxu0 0.0
        %1000 = vmatprep.subr.mxu0 0.0
        %1001 = vmatpush1.msra.mxu0 0.0
        %1002 = vmatprep.subr.mxu0 0.0
        %1003 = vmatpush1.msra.mxu0 0.0
        %1004 = vmatprep.subr.mxu0 0.0
        %1005 = vmatpush1.msra.mxu0 0.0
        %1006 = vmatprep.subr.mxu0 0.0
        %1007 = vmatpush1.msra.mxu0 0.0
        %1008 = vmatprep.subr.mxu0 0.0
        %1009 = vmatpush1.msra.mxu0 0.0
        %1010 = vmatprep.subr.mxu0 0.0
        %1011 = vmatpush1.msra.mxu0 0.0
        %1012 = vmatprep.subr.mxu0 0.0
        %1013 = vmatpush1.msra.mxu0 0.0
        %1014 = vmatprep.subr.mxu0 0.0
        %1015 = vmatpush1.msra.mxu0 0.0
        %1016 = vmatprep.subr.mxu0 0.0
        %1017 = vmatpush1.msra.mxu0 0.0
        %1018 = vmatprep.subr.mxu0 0.0
        %1019 = vmatpush1.msra.mxu0 0.0
        %1020 = vmatprep.subr.mxu0 0.0
        %1021 = vmatpush1.msra.mxu0 0.0
        %1022 = vmatprep.subr.mxu0 0.0
        %1023 = vmatpush1.msra.mxu0 0.0
        %1024 = vmatprep.subr.mxu0 0.0
        %1025 = vmatpush1.msra.mxu0 0.0
        %1026 = vmatprep.subr.mxu0 0.0
        %1027 = vmatpush1.msra.mxu0 0.0
        %1028 = vmatprep.subr.mxu0 0.0
        %1029 = vmatpush1.msra.mxu0 0.0
        %1030 = vmatprep.subr.mxu0 0.0
        %1031 = vmatpush1.msra.mxu0 0.0
        %1032 = vmatprep.subr.mxu0 0.0
        %1033 = vmatpush1.msra.mxu0 0.0
        %1034 = vmatprep.subr.mxu0 0.0
        %1035 = vmatpush1.msra.mxu0 0.0
        %1036 = vmatprep.subr.mxu0 0.0
        %1037 = vmatpush1.msra.mxu0 0.0
        %1038 = vmatprep.subr.mxu0 0.0
        %1039 = vmatpush1.msra.mxu0 0.0
        %1040 = vmatprep.subr.mxu0 0.0
        %1041 = vmatpush1.msra.mxu0 0.0
        %1042 = vmatprep.subr.mxu0 0.0
        %1043 = vmatpush1.msra.mxu0 0.0
        %1044 = vmatprep.subr.mxu0 0.0
        %1045 = vmatpush1.msra.mxu0 0.0
        %1046 = vmatprep.subr.mxu0 0.0
        %1047 = vmatpush1.msra.mxu0 0.0
        %1048 = vmatprep.subr.mxu0 0.0
        %1049 = vmatpush1.msra.mxu0 0.0
        %1050 = vmatprep.subr.mxu0 0.0
        %1051 = vmatpush1.msra.mxu0 0.0
        %1052 = vmatprep.subr.mxu0 0.0
        %1053 = vmatpush1.msra.mxu0 0.0
        %1054 = vmatprep.mubr.f32.mxu0 0.0
        %1055 = vmatmul.mubr.f32.gmra.mrb[0].mxu0 %v985
        %v1056 = vpop.f32.mrb[0].mxu0
        %v1057 = vadd.f32 0.0, %v1056
        %v1058 = vpop.f32.mrb[0].mxu0
        %1059 = vmatprep.mubr.f32.mxu0 0.0
        %1060 = vmatmul.mubr.f32.gmra.mrb[0].mxu0 %v988
        %v1061 = vpop.f32.mrb[0].mxu0
        %v1062 = vadd.f32 0.0, %v1061
        %v1063 = vpop.f32.mrb[0].mxu0
        %1064 = vdwg.mxu0
        %v1065 = vmul.f32 %v1057, %v794
        %v1066 = vmul.f32 %v1062, %v794
        %v1068 = vsel %vm550, %v1065, 0
        %v1071 = vsel %vm550, %v1066, 0
        %1073 = vmatprep.subr.mxu0 0.0
        %1074 = vmatpush1.msra.mxu0 %v453
        %1075 = vmatprep.subr.mxu0 0.0
        %1076 = vmatpush1.msra.mxu0 %v454
        %1077 = vmatprep.subr.mxu0 0.0
        %1078 = vmatpush1.msra.mxu0 %v455
        %1079 = vmatprep.subr.mxu0 0.0
        %1080 = vmatpush1.msra.mxu0 %v456
        %1081 = vmatprep.subr.mxu0 0.0
        %1082 = vmatpush1.msra.mxu0 0.0
        %1083 = vmatprep.subr.mxu0 0.0
        %1084 = vmatpush1.msra.mxu0 0.0
        %1085 = vmatprep.subr.mxu0 0.0
        %1086 = vmatpush1.msra.mxu0 0.0
        %1087 = vmatprep.subr.mxu0 0.0
        %1088 = vmatpush1.msra.mxu0 0.0
        %1089 = vmatprep.subr.mxu0 0.0
        %1090 = vmatpush1.msra.mxu0 0.0
        %1091 = vmatprep.subr.mxu0 0.0
        %1092 = vmatpush1.msra.mxu0 0.0
        %1093 = vmatprep.subr.mxu0 0.0
        %1094 = vmatpush1.msra.mxu0 0.0
        %1095 = vmatprep.subr.mxu0 0.0
        %1096 = vmatpush1.msra.mxu0 0.0
        %1097 = vmatprep.subr.mxu0 0.0
        %1098 = vmatpush1.msra.mxu0 0.0
        %1099 = vmatprep.subr.mxu0 0.0
        %1100 = vmatpush1.msra.mxu0 0.0
        %1101 = vmatprep.subr.mxu0 0.0
        %1102 = vmatpush1.msra.mxu0 0.0
        %1103 = vmatprep.subr.mxu0 0.0
        %1104 = vmatpush1.msra.mxu0 0.0
        %1105 = vmatprep.subr.mxu0 0.0
        %1106 = vmatpush1.msra.mxu0 0.0
        %1107 = vmatprep.subr.mxu0 0.0
        %1108 = vmatpush1.msra.mxu0 0.0
        %1109 = vmatprep.subr.mxu0 0.0
        %1110 = vmatpush1.msra.mxu0 0.0
        %1111 = vmatprep.subr.mxu0 0.0
        %1112 = vmatpush1.msra.mxu0 0.0
        %1113 = vmatprep.subr.mxu0 0.0
        %1114 = vmatpush1.msra.mxu0 0.0
        %1115 = vmatprep.subr.mxu0 0.0
        %1116 = vmatpush1.msra.mxu0 0.0
        %1117 = vmatprep.subr.mxu0 0.0
        %1118 = vmatpush1.msra.mxu0 0.0
        %1119 = vmatprep.subr.mxu0 0.0
        %1120 = vmatpush1.msra.mxu0 0.0
        %1121 = vmatprep.subr.mxu0 0.0
        %1122 = vmatpush1.msra.mxu0 0.0
        %1123 = vmatprep.subr.mxu0 0.0
        %1124 = vmatpush1.msra.mxu0 0.0
        %1125 = vmatprep.subr.mxu0 0.0
        %1126 = vmatpush1.msra.mxu0 0.0
        %1127 = vmatprep.subr.mxu0 0.0
        %1128 = vmatpush1.msra.mxu0 0.0
        %1129 = vmatprep.subr.mxu0 0.0
        %1130 = vmatpush1.msra.mxu0 0.0
        %1131 = vmatprep.subr.mxu0 0.0
        %1132 = vmatpush1.msra.mxu0 0.0
        %1133 = vmatprep.subr.mxu0 0.0
        %1134 = vmatpush1.msra.mxu0 0.0
        %1135 = vmatprep.subr.mxu0 0.0
        %1136 = vmatpush1.msra.mxu0 0.0
        %1137 = vmatprep.mubr.f32.mxu0 0.0
        %1138 = vmatmul.mubr.f32.gmra.mrb[0].mxu0 %v1068
        %v1139 = vpop.f32.mrb[0].mxu0
        %v1140 = vadd.f32 0.0, %v1139
        %v1141 = vpop.f32.mrb[0].mxu0
        %1142 = vmatprep.mubr.f32.mxu0 0.0
        %1143 = vmatmul.mubr.f32.gmra.mrb[0].mxu0 %v1071
        %v1144 = vpop.f32.mrb[0].mxu0
        %v1145 = vadd.f32 0.0, %v1144
        %v1146 = vpop.f32.mrb[0].mxu0
        %1147 = vdwg.mxu0
        %v1148 = vmul.f32 %v1140, %v881
        %v1149 = vmul.f32 %v1145, %v881
        %v1151 = vsel %vm550, %v1148, 0
        %v1154 = vsel %vm550, %v1149, 0
        %1156 = vmatprep.subr.mxu0 0.0
        %1157 = vmatpush1.msra.mxu0 %v449
        %1158 = vmatprep.subr.mxu0 0.0
        %1159 = vmatpush1.msra.mxu0 %v450
        %1160 = vmatprep.subr.mxu0 0.0
        %1161 = vmatpush1.msra.mxu0 %v451
        %1162 = vmatprep.subr.mxu0 0.0
        %1163 = vmatpush1.msra.mxu0 %v452
        %1164 = vmatprep.subr.mxu0 0.0
        %1165 = vmatpush1.msra.mxu0 0.0
        %1166 = vmatprep.subr.mxu0 0.0
        %1167 = vmatpush1.msra.mxu0 0.0
        %1168 = vmatprep.subr.mxu0 0.0
        %1169 = vmatpush1.msra.mxu0 0.0
        %1170 = vmatprep.subr.mxu0 0.0
        %1171 = vmatpush1.msra.mxu0 0.0
        %1172 = vmatprep.subr.mxu0 0.0
        %1173 = vmatpush1.msra.mxu0 0.0
        %1174 = vmatprep.subr.mxu0 0.0
        %1175 = vmatpush1.msra.mxu0 0.0
        %1176 = vmatprep.subr.mxu0 0.0
        %1177 = vmatpush1.msra.mxu0 0.0
        %1178 = vmatprep.subr.mxu0 0.0
        %1179 = vmatpush1.msra.mxu0 0.0
        %1180 = vmatprep.subr.mxu0 0.0
        %1181 = vmatpush1.msra.mxu0 0.0
        %1182 = vmatprep.subr.mxu0 0.0
        %1183 = vmatpush1.msra.mxu0 0.0
        %1184 = vmatprep.subr.mxu0 0.0
        %1185 = vmatpush1.msra.mxu0 0.0
        %1186 = vmatprep.subr.mxu0 0.0
        %1187 = vmatpush1.msra.mxu0 0.0
        %1188 = vmatprep.subr.mxu0 0.0
        %1189 = vmatpush1.msra.mxu0 0.0
        %1190 = vmatprep.subr.mxu0 0.0
        %1191 = vmatpush1.msra.mxu0 0.0
        %1192 = vmatprep.subr.mxu0 0.0
        %1193 = vmatpush1.msra.mxu0 0.0
        %1194 = vmatprep.subr.mxu0 0.0
        %1195 = vmatpush1.msra.mxu0 0.0
        %1196 = vmatprep.subr.mxu0 0.0
        %1197 = vmatpush1.msra.mxu0 0.0
        %1198 = vmatprep.subr.mxu0 0.0
        %1199 = vmatpush1.msra.mxu0 0.0
        %1200 = vmatprep.subr.mxu0 0.0
        %1201 = vmatpush1.msra.mxu0 0.0
        %1202 = vmatprep.subr.mxu0 0.0
        %1203 = vmatpush1.msra.mxu0 0.0
        %1204 = vmatprep.subr.mxu0 0.0
        %1205 = vmatpush1.msra.mxu0 0.0
        %1206 = vmatprep.subr.mxu0 0.0
        %1207 = vmatpush1.msra.mxu0 0.0
        %1208 = vmatprep.subr.mxu0 0.0
        %1209 = vmatpush1.msra.mxu0 0.0
        %1210 = vmatprep.subr.mxu0 0.0
        %1211 = vmatpush1.msra.mxu0 0.0
        %1212 = vmatprep.subr.mxu0 0.0
        %1213 = vmatpush1.msra.mxu0 0.0
        %1214 = vmatprep.subr.mxu0 0.0
        %1215 = vmatpush1.msra.mxu0 0.0
        %1216 = vmatprep.subr.mxu0 0.0
        %1217 = vmatpush1.msra.mxu0 0.0
        %1218 = vmatprep.subr.mxu0 0.0
        %1219 = vmatpush1.msra.mxu0 0.0
        %1220 = vmatprep.mubr.f32.mxu0 0.0
        %1221 = vmatmul.mubr.f32.gmra.mrb[0].mxu0 %v1151
        %v1222 = vpop.f32.mrb[0].mxu0
        %v1223 = vadd.f32 0.0, %v1222
        %v1224 = vpop.f32.mrb[0].mxu0
        %1225 = vmatprep.mubr.f32.mxu0 0.0
        %1226 = vmatmul.mubr.f32.gmra.mrb[0].mxu0 %v1154
        %v1227 = vpop.f32.mrb[0].mxu0
        %v1228 = vadd.f32 0.0, %v1227
        %v1229 = vpop.f32.mrb[0].mxu0
        %1230 = vdwg.mxu0
        %v1231 = vmul.f32 %v1223, %v969
        %v1232 = vmul.f32 %v1228, %v969
        %v1233 = vmul.f32 %v1231, %v435
        %v1234 = vmul.f32 %v1232, %v436
        %v1235 = vsel %vm465, %v1233, 0.0
        %1236 = vadd.xlane.f32.xlu0 %v1235
        %v1237 = vpop.xlane.xlu0 %1236
        %v1238 = vsel %vm978, %v1234, 0.0
        %1239 = vadd.xlane.f32.xlu0 %v1238
        %v1240 = vpop.xlane.xlu0 %1239
        %v1241 = vmul.f32 %v1237, -0.5
        %v1242 = vmul.f32 %v1240, -0.5
        %v1243 = vadd.f32 %v982, %v1241
        %v1244 = vadd.f32 %v983, %v1242
        %v1246 = vsel %vm465, %v1231, 0
        %v1249 = vsel %vm465, %v1232, 0
        %1251 = vmatprep.subr.mxu0 0.0
        %1252 = vmatpush1.msra.mxu0 %v714
        %1253 = vmatprep.subr.mxu0 0.0
        %1254 = vmatpush1.msra.mxu0 0.0
        %1255 = vmatprep.subr.mxu0 0.0
        %1256 = vmatpush1.msra.mxu0 0.0
        %1257 = vmatprep.subr.mxu0 0.0
        %1258 = vmatpush1.msra.mxu0 0.0
        %1259 = vmatprep.subr.mxu0 0.0
        %1260 = vmatpush1.msra.mxu0 0.0
        %1261 = vmatprep.subr.mxu0 0.0
        %1262 = vmatpush1.msra.mxu0 0.0
        %1263 = vmatprep.subr.mxu0 0.0
        %1264 = vmatpush1.msra.mxu0 0.0
        %1265 = vmatprep.subr.mxu0 0.0
        %1266 = vmatpush1.msra.mxu0 0.0
        %1267 = vmatprep.subr.mxu0 0.0
        %1268 = vmatpush1.msra.mxu0 0.0
        %1269 = vmatprep.subr.mxu0 0.0
        %1270 = vmatpush1.msra.mxu0 0.0
        %1271 = vmatprep.subr.mxu0 0.0
        %1272 = vmatpush1.msra.mxu0 0.0
        %1273 = vmatprep.subr.mxu0 0.0
        %1274 = vmatpush1.msra.mxu0 0.0
        %1275 = vmatprep.subr.mxu0 0.0
        %1276 = vmatpush1.msra.mxu0 0.0
        %1277 = vmatprep.subr.mxu0 0.0
        %1278 = vmatpush1.msra.mxu0 0.0
        %1279 = vmatprep.subr.mxu0 0.0
        %1280 = vmatpush1.msra.mxu0 0.0
        %1281 = vmatprep.subr.mxu0 0.0
        %1282 = vmatpush1.msra.mxu0 0.0
        %1283 = vmatprep.subr.mxu0 0.0
        %1284 = vmatpush1.msra.mxu0 0.0
        %1285 = vmatprep.subr.mxu0 0.0
        %1286 = vmatpush1.msra.mxu0 0.0
        %1287 = vmatprep.subr.mxu0 0.0
        %1288 = vmatpush1.msra.mxu0 0.0
        %1289 = vmatprep.subr.mxu0 0.0
        %1290 = vmatpush1.msra.mxu0 0.0
        %1291 = vmatprep.subr.mxu0 0.0
        %1292 = vmatpush1.msra.mxu0 0.0
        %1293 = vmatprep.subr.mxu0 0.0
        %1294 = vmatpush1.msra.mxu0 0.0
        %1295 = vmatprep.subr.mxu0 0.0
        %1296 = vmatpush1.msra.mxu0 0.0
        %1297 = vmatprep.subr.mxu0 0.0
        %1298 = vmatpush1.msra.mxu0 0.0
        %1299 = vmatprep.subr.mxu0 0.0
        %1300 = vmatpush1.msra.mxu0 0.0
        %1301 = vmatprep.subr.mxu0 0.0
        %1302 = vmatpush1.msra.mxu0 0.0
        %1303 = vmatprep.subr.mxu0 0.0
        %1304 = vmatpush1.msra.mxu0 0.0
        %1305 = vmatprep.subr.mxu0 0.0
        %1306 = vmatpush1.msra.mxu0 0.0
        %1307 = vmatprep.subr.mxu0 0.0
        %1308 = vmatpush1.msra.mxu0 0.0
        %1309 = vmatprep.subr.mxu0 0.0
        %1310 = vmatpush1.msra.mxu0 0.0
        %1311 = vmatprep.subr.mxu0 0.0
        %1312 = vmatpush1.msra.mxu0 0.0
        %1313 = vmatprep.subr.mxu0 0.0
        %1314 = vmatpush1.msra.mxu0 0.0
        %1315 = vmatprep.mubr.f32.mxu0 0.0
        %1316 = vmatmul.mubr.f32.gmra.mrb[0].mxu0 %v1246
        %v1317 = vpop.f32.mrb[0].mxu0
        %v1318 = vadd.f32 0.0, %v1317
        %v1319 = vpop.f32.mrb[0].mxu0
        %1320 = vmatprep.mubr.f32.mxu0 0.0
        %1321 = vmatmul.mubr.f32.gmra.mrb[0].mxu0 %v1249
        %v1322 = vpop.f32.mrb[0].mxu0
        %v1323 = vadd.f32 0.0, %v1322
        %v1324 = vpop.f32.mrb[0].mxu0
        %1325 = vdwg.mxu0
        %v1326 = vmul.f32 %v1318, %v794
        %v1327 = vmul.f32 %v1323, %v794
        %v1329 = vsel %vm550, %v1326, 0
        %v1332 = vsel %vm550, %v1327, 0
        %1334 = vmatprep.subr.mxu0 0.0
        %1335 = vmatpush1.msra.mxu0 %v453
        %1336 = vmatprep.subr.mxu0 0.0
        %1337 = vmatpush1.msra.mxu0 %v454
        %1338 = vmatprep.subr.mxu0 0.0
        %1339 = vmatpush1.msra.mxu0 %v455
        %1340 = vmatprep.subr.mxu0 0.0
        %1341 = vmatpush1.msra.mxu0 %v456
        %1342 = vmatprep.subr.mxu0 0.0
        %1343 = vmatpush1.msra.mxu0 0.0
        %1344 = vmatprep.subr.mxu0 0.0
        %1345 = vmatpush1.msra.mxu0 0.0
        %1346 = vmatprep.subr.mxu0 0.0
        %1347 = vmatpush1.msra.mxu0 0.0
        %1348 = vmatprep.subr.mxu0 0.0
        %1349 = vmatpush1.msra.mxu0 0.0
        %1350 = vmatprep.subr.mxu0 0.0
        %1351 = vmatpush1.msra.mxu0 0.0
        %1352 = vmatprep.subr.mxu0 0.0
        %1353 = vmatpush1.msra.mxu0 0.0
        %1354 = vmatprep.subr.mxu0 0.0
        %1355 = vmatpush1.msra.mxu0 0.0
        %1356 = vmatprep.subr.mxu0 0.0
        %1357 = vmatpush1.msra.mxu0 0.0
        %1358 = vmatprep.subr.mxu0 0.0
        %1359 = vmatpush1.msra.mxu0 0.0
        %1360 = vmatprep.subr.mxu0 0.0
        %1361 = vmatpush1.msra.mxu0 0.0
        %1362 = vmatprep.subr.mxu0 0.0
        %1363 = vmatpush1.msra.mxu0 0.0
        %1364 = vmatprep.subr.mxu0 0.0
        %1365 = vmatpush1.msra.mxu0 0.0
        %1366 = vmatprep.subr.mxu0 0.0
        %1367 = vmatpush1.msra.mxu0 0.0
        %1368 = vmatprep.subr.mxu0 0.0
        %1369 = vmatpush1.msra.mxu0 0.0
        %1370 = vmatprep.subr.mxu0 0.0
        %1371 = vmatpush1.msra.mxu0 0.0
        %1372 = vmatprep.subr.mxu0 0.0
        %1373 = vmatpush1.msra.mxu0 0.0
        %1374 = vmatprep.subr.mxu0 0.0
        %1375 = vmatpush1.msra.mxu0 0.0
        %1376 = vmatprep.subr.mxu0 0.0
        %1377 = vmatpush1.msra.mxu0 0.0
        %1378 = vmatprep.subr.mxu0 0.0
        %1379 = vmatpush1.msra.mxu0 0.0
        %1380 = vmatprep.subr.mxu0 0.0
        %1381 = vmatpush1.msra.mxu0 0.0
        %1382 = vmatprep.subr.mxu0 0.0
        %1383 = vmatpush1.msra.mxu0 0.0
        %1384 = vmatprep.subr.mxu0 0.0
        %1385 = vmatpush1.msra.mxu0 0.0
        %1386 = vmatprep.subr.mxu0 0.0
        %1387 = vmatpush1.msra.mxu0 0.0
        %1388 = vmatprep.subr.mxu0 0.0
        %1389 = vmatpush1.msra.mxu0 0.0
        %1390 = vmatprep.subr.mxu0 0.0
        %1391 = vmatpush1.msra.mxu0 0.0
        %1392 = vmatprep.subr.mxu0 0.0
        %1393 = vmatpush1.msra.mxu0 0.0
        %1394 = vmatprep.subr.mxu0 0.0
        %1395 = vmatpush1.msra.mxu0 0.0
        %1396 = vmatprep.subr.mxu0 0.0
        %1397 = vmatpush1.msra.mxu0 0.0
        %1398 = vmatprep.mubr.f32.mxu0 0.0
        %1399 = vmatmul.mubr.f32.gmra.mrb[0].mxu0 %v1329
        %v1400 = vpop.f32.mrb[0].mxu0
        %v1401 = vadd.f32 0.0, %v1400
        %v1402 = vpop.f32.mrb[0].mxu0
        %1403 = vmatprep.mubr.f32.mxu0 0.0
        %1404 = vmatmul.mubr.f32.gmra.mrb[0].mxu0 %v1332
        %v1405 = vpop.f32.mrb[0].mxu0
        %v1406 = vadd.f32 0.0, %v1405
        %v1407 = vpop.f32.mrb[0].mxu0
        %1408 = vdwg.mxu0
        %v1409 = vmul.f32 %v1401, %v881
        %v1410 = vmul.f32 %v1406, %v881
        %v1412 = vsel %vm550, %v1409, 0
        %v1415 = vsel %vm550, %v1410, 0
        %1417 = vmatprep.subr.mxu0 0.0
        %1418 = vmatpush1.msra.mxu0 %v449
        %1419 = vmatprep.subr.mxu0 0.0
        %1420 = vmatpush1.msra.mxu0 %v450
        %1421 = vmatprep.subr.mxu0 0.0
        %1422 = vmatpush1.msra.mxu0 %v451
        %1423 = vmatprep.subr.mxu0 0.0
        %1424 = vmatpush1.msra.mxu0 %v452
        %1425 = vmatprep.subr.mxu0 0.0
        %1426 = vmatpush1.msra.mxu0 0.0
        %1427 = vmatprep.subr.mxu0 0.0
        %1428 = vmatpush1.msra.mxu0 0.0
        %1429 = vmatprep.subr.mxu0 0.0
        %1430 = vmatpush1.msra.mxu0 0.0
        %1431 = vmatprep.subr.mxu0 0.0
        %1432 = vmatpush1.msra.mxu0 0.0
        %1433 = vmatprep.subr.mxu0 0.0
        %1434 = vmatpush1.msra.mxu0 0.0
        %1435 = vmatprep.subr.mxu0 0.0
        %1436 = vmatpush1.msra.mxu0 0.0
        %1437 = vmatprep.subr.mxu0 0.0
        %1438 = vmatpush1.msra.mxu0 0.0
        %1439 = vmatprep.subr.mxu0 0.0
        %1440 = vmatpush1.msra.mxu0 0.0
        %1441 = vmatprep.subr.mxu0 0.0
        %1442 = vmatpush1.msra.mxu0 0.0
        %1443 = vmatprep.subr.mxu0 0.0
        %1444 = vmatpush1.msra.mxu0 0.0
        %1445 = vmatprep.subr.mxu0 0.0
        %1446 = vmatpush1.msra.mxu0 0.0
        %1447 = vmatprep.subr.mxu0 0.0
        %1448 = vmatpush1.msra.mxu0 0.0
        %1449 = vmatprep.subr.mxu0 0.0
        %1450 = vmatpush1.msra.mxu0 0.0
        %1451 = vmatprep.subr.mxu0 0.0
        %1452 = vmatpush1.msra.mxu0 0.0
        %1453 = vmatprep.subr.mxu0 0.0
        %1454 = vmatpush1.msra.mxu0 0.0
        %1455 = vmatprep.subr.mxu0 0.0
        %1456 = vmatpush1.msra.mxu0 0.0
        %1457 = vmatprep.subr.mxu0 0.0
        %1458 = vmatpush1.msra.mxu0 0.0
        %1459 = vmatprep.subr.mxu0 0.0
        %1460 = vmatpush1.msra.mxu0 0.0
        %1461 = vmatprep.subr.mxu0 0.0
        %1462 = vmatpush1.msra.mxu0 0.0
        %1463 = vmatprep.subr.mxu0 0.0
        %1464 = vmatpush1.msra.mxu0 0.0
        %1465 = vmatprep.subr.mxu0 0.0
        %1466 = vmatpush1.msra.mxu0 0.0
        %1467 = vmatprep.subr.mxu0 0.0
        %1468 = vmatpush1.msra.mxu0 0.0
        %1469 = vmatprep.subr.mxu0 0.0
        %1470 = vmatpush1.msra.mxu0 0.0
        %1471 = vmatprep.subr.mxu0 0.0
        %1472 = vmatpush1.msra.mxu0 0.0
        %1473 = vmatprep.subr.mxu0 0.0
        %1474 = vmatpush1.msra.mxu0 0.0
        %1475 = vmatprep.subr.mxu0 0.0
        %1476 = vmatpush1.msra.mxu0 0.0
        %1477 = vmatprep.subr.mxu0 0.0
        %1478 = vmatpush1.msra.mxu0 0.0
        %1479 = vmatprep.subr.mxu0 0.0
        %1480 = vmatpush1.msra.mxu0 0.0
        %1481 = vmatprep.mubr.f32.mxu0 0.0
        %1482 = vmatmul.mubr.f32.gmra.mrb[0].mxu0 %v1412
        %v1483 = vpop.f32.mrb[0].mxu0
        %v1484 = vadd.f32 0.0, %v1483
        %v1485 = vpop.f32.mrb[0].mxu0
        %1486 = vmatprep.mubr.f32.mxu0 0.0
        %1487 = vmatmul.mubr.f32.gmra.mrb[0].mxu0 %v1415
        %v1488 = vpop.f32.mrb[0].mxu0
        %v1489 = vadd.f32 0.0, %v1488
        %v1490 = vpop.f32.mrb[0].mxu0
        %1491 = vdwg.mxu0
        %v1492 = vmul.f32 %v1484, %v969
        %v1493 = vmul.f32 %v1489, %v969
        %v1494 = vmul.f32 %v1492, %v435
        %v1495 = vmul.f32 %v1493, %v436
        %v1496 = vsel %vm465, %v1494, 0.0
        %1497 = vadd.xlane.f32.xlu0 %v1496
        %v1498 = vpop.xlane.xlu0 %1497
        %v1499 = vsel %vm978, %v1495, 0.0
        %1500 = vadd.xlane.f32.xlu0 %v1499
        %v1501 = vpop.xlane.xlu0 %1500
        %v1502 = vmul.f32 %v1498, 0.33333334
        %v1503 = vmul.f32 %v1501, 0.33333334
        %v1504 = vadd.f32 %v1243, %v1502
        %v1505 = vadd.f32 %v1244, %v1503
        %v1507 = vsel %vm465, %v1492, 0
        %v1510 = vsel %vm465, %v1493, 0
        %1512 = vmatprep.subr.mxu0 0.0
        %1513 = vmatpush1.msra.mxu0 %v714
        %1514 = vmatprep.subr.mxu0 0.0
        %1515 = vmatpush1.msra.mxu0 0.0
        %1516 = vmatprep.subr.mxu0 0.0
        %1517 = vmatpush1.msra.mxu0 0.0
        %1518 = vmatprep.subr.mxu0 0.0
        %1519 = vmatpush1.msra.mxu0 0.0
        %1520 = vmatprep.subr.mxu0 0.0
        %1521 = vmatpush1.msra.mxu0 0.0
        %1522 = vmatprep.subr.mxu0 0.0
        %1523 = vmatpush1.msra.mxu0 0.0
        %1524 = vmatprep.subr.mxu0 0.0
        %1525 = vmatpush1.msra.mxu0 0.0
        %1526 = vmatprep.subr.mxu0 0.0
        %1527 = vmatpush1.msra.mxu0 0.0
        %1528 = vmatprep.subr.mxu0 0.0
        %1529 = vmatpush1.msra.mxu0 0.0
        %1530 = vmatprep.subr.mxu0 0.0
        %1531 = vmatpush1.msra.mxu0 0.0
        %1532 = vmatprep.subr.mxu0 0.0
        %1533 = vmatpush1.msra.mxu0 0.0
        %1534 = vmatprep.subr.mxu0 0.0
        %1535 = vmatpush1.msra.mxu0 0.0
        %1536 = vmatprep.subr.mxu0 0.0
        %1537 = vmatpush1.msra.mxu0 0.0
        %1538 = vmatprep.subr.mxu0 0.0
        %1539 = vmatpush1.msra.mxu0 0.0
        %1540 = vmatprep.subr.mxu0 0.0
        %1541 = vmatpush1.msra.mxu0 0.0
        %1542 = vmatprep.subr.mxu0 0.0
        %1543 = vmatpush1.msra.mxu0 0.0
        %1544 = vmatprep.subr.mxu0 0.0
        %1545 = vmatpush1.msra.mxu0 0.0
        %1546 = vmatprep.subr.mxu0 0.0
        %1547 = vmatpush1.msra.mxu0 0.0
        %1548 = vmatprep.subr.mxu0 0.0
        %1549 = vmatpush1.msra.mxu0 0.0
        %1550 = vmatprep.subr.mxu0 0.0
        %1551 = vmatpush1.msra.mxu0 0.0
        %1552 = vmatprep.subr.mxu0 0.0
        %1553 = vmatpush1.msra.mxu0 0.0
        %1554 = vmatprep.subr.mxu0 0.0
        %1555 = vmatpush1.msra.mxu0 0.0
        %1556 = vmatprep.subr.mxu0 0.0
        %1557 = vmatpush1.msra.mxu0 0.0
        %1558 = vmatprep.subr.mxu0 0.0
        %1559 = vmatpush1.msra.mxu0 0.0
        %1560 = vmatprep.subr.mxu0 0.0
        %1561 = vmatpush1.msra.mxu0 0.0
        %1562 = vmatprep.subr.mxu0 0.0
        %1563 = vmatpush1.msra.mxu0 0.0
        %1564 = vmatprep.subr.mxu0 0.0
        %1565 = vmatpush1.msra.mxu0 0.0
        %1566 = vmatprep.subr.mxu0 0.0
        %1567 = vmatpush1.msra.mxu0 0.0
        %1568 = vmatprep.subr.mxu0 0.0
        %1569 = vmatpush1.msra.mxu0 0.0
        %1570 = vmatprep.subr.mxu0 0.0
        %1571 = vmatpush1.msra.mxu0 0.0
        %1572 = vmatprep.subr.mxu0 0.0
        %1573 = vmatpush1.msra.mxu0 0.0
        %1574 = vmatprep.subr.mxu0 0.0
        %1575 = vmatpush1.msra.mxu0 0.0
        %1576 = vmatprep.mubr.f32.mxu0 0.0
        %1577 = vmatmul.mubr.f32.gmra.mrb[0].mxu0 %v1507
        %v1578 = vpop.f32.mrb[0].mxu0
        %v1579 = vadd.f32 0.0, %v1578
        %v1580 = vpop.f32.mrb[0].mxu0
        %1581 = vmatprep.mubr.f32.mxu0 0.0
        %1582 = vmatmul.mubr.f32.gmra.mrb[0].mxu0 %v1510
        %v1583 = vpop.f32.mrb[0].mxu0
        %v1584 = vadd.f32 0.0, %v1583
        %v1585 = vpop.f32.mrb[0].mxu0
        %1586 = vdwg.mxu0
        %v1587 = vmul.f32 %v1579, %v794
        %v1588 = vmul.f32 %v1584, %v794
        %v1590 = vsel %vm550, %v1587, 0
        %v1593 = vsel %vm550, %v1588, 0
        %1595 = vmatprep.subr.mxu0 0.0
        %1596 = vmatpush1.msra.mxu0 %v453
        %1597 = vmatprep.subr.mxu0 0.0
        %1598 = vmatpush1.msra.mxu0 %v454
        %1599 = vmatprep.subr.mxu0 0.0
        %1600 = vmatpush1.msra.mxu0 %v455
        %1601 = vmatprep.subr.mxu0 0.0
        %1602 = vmatpush1.msra.mxu0 %v456
        %1603 = vmatprep.subr.mxu0 0.0
        %1604 = vmatpush1.msra.mxu0 0.0
        %1605 = vmatprep.subr.mxu0 0.0
        %1606 = vmatpush1.msra.mxu0 0.0
        %1607 = vmatprep.subr.mxu0 0.0
        %1608 = vmatpush1.msra.mxu0 0.0
        %1609 = vmatprep.subr.mxu0 0.0
        %1610 = vmatpush1.msra.mxu0 0.0
        %1611 = vmatprep.subr.mxu0 0.0
        %1612 = vmatpush1.msra.mxu0 0.0
        %1613 = vmatprep.subr.mxu0 0.0
        %1614 = vmatpush1.msra.mxu0 0.0
        %1615 = vmatprep.subr.mxu0 0.0
        %1616 = vmatpush1.msra.mxu0 0.0
        %1617 = vmatprep.subr.mxu0 0.0
        %1618 = vmatpush1.msra.mxu0 0.0
        %1619 = vmatprep.subr.mxu0 0.0
        %1620 = vmatpush1.msra.mxu0 0.0
        %1621 = vmatprep.subr.mxu0 0.0
        %1622 = vmatpush1.msra.mxu0 0.0
        %1623 = vmatprep.subr.mxu0 0.0
        %1624 = vmatpush1.msra.mxu0 0.0
        %1625 = vmatprep.subr.mxu0 0.0
        %1626 = vmatpush1.msra.mxu0 0.0
        %1627 = vmatprep.subr.mxu0 0.0
        %1628 = vmatpush1.msra.mxu0 0.0
        %1629 = vmatprep.subr.mxu0 0.0
        %1630 = vmatpush1.msra.mxu0 0.0
        %1631 = vmatprep.subr.mxu0 0.0
        %1632 = vmatpush1.msra.mxu0 0.0
        %1633 = vmatprep.subr.mxu0 0.0
        %1634 = vmatpush1.msra.mxu0 0.0
        %1635 = vmatprep.subr.mxu0 0.0
        %1636 = vmatpush1.msra.mxu0 0.0
        %1637 = vmatprep.subr.mxu0 0.0
        %1638 = vmatpush1.msra.mxu0 0.0
        %1639 = vmatprep.subr.mxu0 0.0
        %1640 = vmatpush1.msra.mxu0 0.0
        %1641 = vmatprep.subr.mxu0 0.0
        %1642 = vmatpush1.msra.mxu0 0.0
        %1643 = vmatprep.subr.mxu0 0.0
        %1644 = vmatpush1.msra.mxu0 0.0
        %1645 = vmatprep.subr.mxu0 0.0
        %1646 = vmatpush1.msra.mxu0 0.0
        %1647 = vmatprep.subr.mxu0 0.0
        %1648 = vmatpush1.msra.mxu0 0.0
        %1649 = vmatprep.subr.mxu0 0.0
        %1650 = vmatpush1.msra.mxu0 0.0
        %1651 = vmatprep.subr.mxu0 0.0
        %1652 = vmatpush1.msra.mxu0 0.0
        %1653 = vmatprep.subr.mxu0 0.0
        %1654 = vmatpush1.msra.mxu0 0.0
        %1655 = vmatprep.subr.mxu0 0.0
        %1656 = vmatpush1.msra.mxu0 0.0
        %1657 = vmatprep.subr.mxu0 0.0
        %1658 = vmatpush1.msra.mxu0 0.0
        %1659 = vmatprep.mubr.f32.mxu0 0.0
        %1660 = vmatmul.mubr.f32.gmra.mrb[0].mxu0 %v1590
        %v1661 = vpop.f32.mrb[0].mxu0
        %v1662 = vadd.f32 0.0, %v1661
        %v1663 = vpop.f32.mrb[0].mxu0
        %1664 = vmatprep.mubr.f32.mxu0 0.0
        %1665 = vmatmul.mubr.f32.gmra.mrb[0].mxu0 %v1593
        %v1666 = vpop.f32.mrb[0].mxu0
        %v1667 = vadd.f32 0.0, %v1666
        %v1668 = vpop.f32.mrb[0].mxu0
        %1669 = vdwg.mxu0
        %v1670 = vmul.f32 %v1662, %v881
        %v1671 = vmul.f32 %v1667, %v881
        %v1673 = vsel %vm550, %v1670, 0
        %v1676 = vsel %vm550, %v1671, 0
        %1678 = vmatprep.subr.mxu0 0.0
        %1679 = vmatpush1.msra.mxu0 %v449
        %1680 = vmatprep.subr.mxu0 0.0
        %1681 = vmatpush1.msra.mxu0 %v450
        %1682 = vmatprep.subr.mxu0 0.0
        %1683 = vmatpush1.msra.mxu0 %v451
        %1684 = vmatprep.subr.mxu0 0.0
        %1685 = vmatpush1.msra.mxu0 %v452
        %1686 = vmatprep.subr.mxu0 0.0
        %1687 = vmatpush1.msra.mxu0 0.0
        %1688 = vmatprep.subr.mxu0 0.0
        %1689 = vmatpush1.msra.mxu0 0.0
        %1690 = vmatprep.subr.mxu0 0.0
        %1691 = vmatpush1.msra.mxu0 0.0
        %1692 = vmatprep.subr.mxu0 0.0
        %1693 = vmatpush1.msra.mxu0 0.0
        %1694 = vmatprep.subr.mxu0 0.0
        %1695 = vmatpush1.msra.mxu0 0.0
        %1696 = vmatprep.subr.mxu0 0.0
        %1697 = vmatpush1.msra.mxu0 0.0
        %1698 = vmatprep.subr.mxu0 0.0
        %1699 = vmatpush1.msra.mxu0 0.0
        %1700 = vmatprep.subr.mxu0 0.0
        %1701 = vmatpush1.msra.mxu0 0.0
        %1702 = vmatprep.subr.mxu0 0.0
        %1703 = vmatpush1.msra.mxu0 0.0
        %1704 = vmatprep.subr.mxu0 0.0
        %1705 = vmatpush1.msra.mxu0 0.0
        %1706 = vmatprep.subr.mxu0 0.0
        %1707 = vmatpush1.msra.mxu0 0.0
        %1708 = vmatprep.subr.mxu0 0.0
        %1709 = vmatpush1.msra.mxu0 0.0
        %1710 = vmatprep.subr.mxu0 0.0
        %1711 = vmatpush1.msra.mxu0 0.0
        %1712 = vmatprep.subr.mxu0 0.0
        %1713 = vmatpush1.msra.mxu0 0.0
        %1714 = vmatprep.subr.mxu0 0.0
        %1715 = vmatpush1.msra.mxu0 0.0
        %1716 = vmatprep.subr.mxu0 0.0
        %1717 = vmatpush1.msra.mxu0 0.0
        %1718 = vmatprep.subr.mxu0 0.0
        %1719 = vmatpush1.msra.mxu0 0.0
        %1720 = vmatprep.subr.mxu0 0.0
        %1721 = vmatpush1.msra.mxu0 0.0
        %1722 = vmatprep.subr.mxu0 0.0
        %1723 = vmatpush1.msra.mxu0 0.0
        %1724 = vmatprep.subr.mxu0 0.0
        %1725 = vmatpush1.msra.mxu0 0.0
        %1726 = vmatprep.subr.mxu0 0.0
        %1727 = vmatpush1.msra.mxu0 0.0
        %1728 = vmatprep.subr.mxu0 0.0
        %1729 = vmatpush1.msra.mxu0 0.0
        %1730 = vmatprep.subr.mxu0 0.0
        %1731 = vmatpush1.msra.mxu0 0.0
        %1732 = vmatprep.subr.mxu0 0.0
        %1733 = vmatpush1.msra.mxu0 0.0
        %1734 = vmatprep.subr.mxu0 0.0
        %1735 = vmatpush1.msra.mxu0 0.0
        %1736 = vmatprep.subr.mxu0 0.0
        %1737 = vmatpush1.msra.mxu0 0.0
        %1738 = vmatprep.subr.mxu0 0.0
        %1739 = vmatpush1.msra.mxu0 0.0
        %1740 = vmatprep.subr.mxu0 0.0
        %1741 = vmatpush1.msra.mxu0 0.0
        %1742 = vmatprep.mubr.f32.mxu0 0.0
        %1743 = vmatmul.mubr.f32.gmra.mrb[0].mxu0 %v1673
        %v1744 = vpop.f32.mrb[0].mxu0
        %v1745 = vadd.f32 0.0, %v1744
        %v1746 = vpop.f32.mrb[0].mxu0
        %1747 = vmatprep.mubr.f32.mxu0 0.0
        %1748 = vmatmul.mubr.f32.gmra.mrb[0].mxu0 %v1676
        %v1749 = vpop.f32.mrb[0].mxu0
        %v1750 = vadd.f32 0.0, %v1749
        %v1751 = vpop.f32.mrb[0].mxu0
        %1752 = vdwg.mxu0
        %v1753 = vmul.f32 %v1745, %v969
        %v1754 = vmul.f32 %v1750, %v969
        %v1755 = vmul.f32 %v1753, %v435
        %v1756 = vmul.f32 %v1754, %v436
        %v1757 = vsel %vm465, %v1755, 0.0
        %1758 = vadd.xlane.f32.xlu0 %v1757
        %v1759 = vpop.xlane.xlu0 %1758
        %v1760 = vsel %vm978, %v1756, 0.0
        %1761 = vadd.xlane.f32.xlu0 %v1760
        %v1762 = vpop.xlane.xlu0 %1761
        %v1763 = vmul.f32 %v1759, -0.25
        %v1764 = vmul.f32 %v1762, -0.25
        %v1765 = vadd.f32 %v1504, %v1763
        %v1766 = vadd.f32 %v1505, %v1764
        %v1768 = vsel %vm465, %v1753, 0
        %v1771 = vsel %vm465, %v1754, 0
        %1773 = vmatprep.subr.mxu0 0.0
        %1774 = vmatpush1.msra.mxu0 %v714
        %1775 = vmatprep.subr.mxu0 0.0
        %1776 = vmatpush1.msra.mxu0 0.0
        %1777 = vmatprep.subr.mxu0 0.0
        %1778 = vmatpush1.msra.mxu0 0.0
        %1779 = vmatprep.subr.mxu0 0.0
        %1780 = vmatpush1.msra.mxu0 0.0
        %1781 = vmatprep.subr.mxu0 0.0
        %1782 = vmatpush1.msra.mxu0 0.0
        %1783 = vmatprep.subr.mxu0 0.0
        %1784 = vmatpush1.msra.mxu0 0.0
        %1785 = vmatprep.subr.mxu0 0.0
        %1786 = vmatpush1.msra.mxu0 0.0
        %1787 = vmatprep.subr.mxu0 0.0
        %1788 = vmatpush1.msra.mxu0 0.0
        %1789 = vmatprep.subr.mxu0 0.0
        %1790 = vmatpush1.msra.mxu0 0.0
        %1791 = vmatprep.subr.mxu0 0.0
        %1792 = vmatpush1.msra.mxu0 0.0
        %1793 = vmatprep.subr.mxu0 0.0
        %1794 = vmatpush1.msra.mxu0 0.0
        %1795 = vmatprep.subr.mxu0 0.0
        %1796 = vmatpush1.msra.mxu0 0.0
        %1797 = vmatprep.subr.mxu0 0.0
        %1798 = vmatpush1.msra.mxu0 0.0
        %1799 = vmatprep.subr.mxu0 0.0
        %1800 = vmatpush1.msra.mxu0 0.0
        %1801 = vmatprep.subr.mxu0 0.0
        %1802 = vmatpush1.msra.mxu0 0.0
        %1803 = vmatprep.subr.mxu0 0.0
        %1804 = vmatpush1.msra.mxu0 0.0
        %1805 = vmatprep.subr.mxu0 0.0
        %1806 = vmatpush1.msra.mxu0 0.0
        %1807 = vmatprep.subr.mxu0 0.0
        %1808 = vmatpush1.msra.mxu0 0.0
        %1809 = vmatprep.subr.mxu0 0.0
        %1810 = vmatpush1.msra.mxu0 0.0
        %1811 = vmatprep.subr.mxu0 0.0
        %1812 = vmatpush1.msra.mxu0 0.0
        %1813 = vmatprep.subr.mxu0 0.0
        %1814 = vmatpush1.msra.mxu0 0.0
        %1815 = vmatprep.subr.mxu0 0.0
        %1816 = vmatpush1.msra.mxu0 0.0
        %1817 = vmatprep.subr.mxu0 0.0
        %1818 = vmatpush1.msra.mxu0 0.0
        %1819 = vmatprep.subr.mxu0 0.0
        %1820 = vmatpush1.msra.mxu0 0.0
        %1821 = vmatprep.subr.mxu0 0.0
        %1822 = vmatpush1.msra.mxu0 0.0
        %1823 = vmatprep.subr.mxu0 0.0
        %1824 = vmatpush1.msra.mxu0 0.0
        %1825 = vmatprep.subr.mxu0 0.0
        %1826 = vmatpush1.msra.mxu0 0.0
        %1827 = vmatprep.subr.mxu0 0.0
        %1828 = vmatpush1.msra.mxu0 0.0
        %1829 = vmatprep.subr.mxu0 0.0
        %1830 = vmatpush1.msra.mxu0 0.0
        %1831 = vmatprep.subr.mxu0 0.0
        %1832 = vmatpush1.msra.mxu0 0.0
        %1833 = vmatprep.subr.mxu0 0.0
        %1834 = vmatpush1.msra.mxu0 0.0
        %1835 = vmatprep.subr.mxu0 0.0
        %1836 = vmatpush1.msra.mxu0 0.0
        %1837 = vmatprep.mubr.f32.mxu0 0.0
        %1838 = vmatmul.mubr.f32.gmra.mrb[0].mxu0 %v1768
        %v1839 = vpop.f32.mrb[0].mxu0
        %v1840 = vadd.f32 0.0, %v1839
        %v1841 = vpop.f32.mrb[0].mxu0
        %1842 = vmatprep.mubr.f32.mxu0 0.0
        %1843 = vmatmul.mubr.f32.gmra.mrb[0].mxu0 %v1771
        %v1844 = vpop.f32.mrb[0].mxu0
        %v1845 = vadd.f32 0.0, %v1844
        %v1846 = vpop.f32.mrb[0].mxu0
        %1847 = vdwg.mxu0
        %v1848 = vmul.f32 %v1840, %v794
        %v1849 = vmul.f32 %v1845, %v794
        %v1851 = vsel %vm550, %v1848, 0
        %v1854 = vsel %vm550, %v1849, 0
        %1856 = vmatprep.subr.mxu0 0.0
        %1857 = vmatpush1.msra.mxu0 %v453
        %1858 = vmatprep.subr.mxu0 0.0
        %1859 = vmatpush1.msra.mxu0 %v454
        %1860 = vmatprep.subr.mxu0 0.0
        %1861 = vmatpush1.msra.mxu0 %v455
        %1862 = vmatprep.subr.mxu0 0.0
        %1863 = vmatpush1.msra.mxu0 %v456
        %1864 = vmatprep.subr.mxu0 0.0
        %1865 = vmatpush1.msra.mxu0 0.0
        %1866 = vmatprep.subr.mxu0 0.0
        %1867 = vmatpush1.msra.mxu0 0.0
        %1868 = vmatprep.subr.mxu0 0.0
        %1869 = vmatpush1.msra.mxu0 0.0
        %1870 = vmatprep.subr.mxu0 0.0
        %1871 = vmatpush1.msra.mxu0 0.0
        %1872 = vmatprep.subr.mxu0 0.0
        %1873 = vmatpush1.msra.mxu0 0.0
        %1874 = vmatprep.subr.mxu0 0.0
        %1875 = vmatpush1.msra.mxu0 0.0
        %1876 = vmatprep.subr.mxu0 0.0
        %1877 = vmatpush1.msra.mxu0 0.0
        %1878 = vmatprep.subr.mxu0 0.0
        %1879 = vmatpush1.msra.mxu0 0.0
        %1880 = vmatprep.subr.mxu0 0.0
        %1881 = vmatpush1.msra.mxu0 0.0
        %1882 = vmatprep.subr.mxu0 0.0
        %1883 = vmatpush1.msra.mxu0 0.0
        %1884 = vmatprep.subr.mxu0 0.0
        %1885 = vmatpush1.msra.mxu0 0.0
        %1886 = vmatprep.subr.mxu0 0.0
        %1887 = vmatpush1.msra.mxu0 0.0
        %1888 = vmatprep.subr.mxu0 0.0
        %1889 = vmatpush1.msra.mxu0 0.0
        %1890 = vmatprep.subr.mxu0 0.0
        %1891 = vmatpush1.msra.mxu0 0.0
        %1892 = vmatprep.subr.mxu0 0.0
        %1893 = vmatpush1.msra.mxu0 0.0
        %1894 = vmatprep.subr.mxu0 0.0
        %1895 = vmatpush1.msra.mxu0 0.0
        %1896 = vmatprep.subr.mxu0 0.0
        %1897 = vmatpush1.msra.mxu0 0.0
        %1898 = vmatprep.subr.mxu0 0.0
        %1899 = vmatpush1.msra.mxu0 0.0
        %1900 = vmatprep.subr.mxu0 0.0
        %1901 = vmatpush1.msra.mxu0 0.0
        %1902 = vmatprep.subr.mxu0 0.0
        %1903 = vmatpush1.msra.mxu0 0.0
        %1904 = vmatprep.subr.mxu0 0.0
        %1905 = vmatpush1.msra.mxu0 0.0
        %1906 = vmatprep.subr.mxu0 0.0
        %1907 = vmatpush1.msra.mxu0 0.0
        %1908 = vmatprep.subr.mxu0 0.0
        %1909 = vmatpush1.msra.mxu0 0.0
        %1910 = vmatprep.subr.mxu0 0.0
        %1911 = vmatpush1.msra.mxu0 0.0
        %1912 = vmatprep.subr.mxu0 0.0
        %1913 = vmatpush1.msra.mxu0 0.0
        %1914 = vmatprep.subr.mxu0 0.0
        %1915 = vmatpush1.msra.mxu0 0.0
        %1916 = vmatprep.subr.mxu0 0.0
        %1917 = vmatpush1.msra.mxu0 0.0
        %1918 = vmatprep.subr.mxu0 0.0
        %1919 = vmatpush1.msra.mxu0 0.0
        %1920 = vmatprep.mubr.f32.mxu0 0.0
        %1921 = vmatmul.mubr.f32.gmra.mrb[0].mxu0 %v1851
        %v1922 = vpop.f32.mrb[0].mxu0
        %v1923 = vadd.f32 0.0, %v1922
        %v1924 = vpop.f32.mrb[0].mxu0
        %1925 = vmatprep.mubr.f32.mxu0 0.0
        %1926 = vmatmul.mubr.f32.gmra.mrb[0].mxu0 %v1854
        %v1927 = vpop.f32.mrb[0].mxu0
        %v1928 = vadd.f32 0.0, %v1927
        %v1929 = vpop.f32.mrb[0].mxu0
        %1930 = vdwg.mxu0
        %v1931 = vmul.f32 %v1923, %v881
        %v1932 = vmul.f32 %v1928, %v881
        %v1934 = vsel %vm550, %v1931, 0
        %v1937 = vsel %vm550, %v1932, 0
        %1939 = vmatprep.subr.mxu0 0.0
        %1940 = vmatpush1.msra.mxu0 %v449
        %1941 = vmatprep.subr.mxu0 0.0
        %1942 = vmatpush1.msra.mxu0 %v450
        %1943 = vmatprep.subr.mxu0 0.0
        %1944 = vmatpush1.msra.mxu0 %v451
        %1945 = vmatprep.subr.mxu0 0.0
        %1946 = vmatpush1.msra.mxu0 %v452
        %1947 = vmatprep.subr.mxu0 0.0
        %1948 = vmatpush1.msra.mxu0 0.0
        %1949 = vmatprep.subr.mxu0 0.0
        %1950 = vmatpush1.msra.mxu0 0.0
        %1951 = vmatprep.subr.mxu0 0.0
        %1952 = vmatpush1.msra.mxu0 0.0
        %1953 = vmatprep.subr.mxu0 0.0
        %1954 = vmatpush1.msra.mxu0 0.0
        %1955 = vmatprep.subr.mxu0 0.0
        %1956 = vmatpush1.msra.mxu0 0.0
        %1957 = vmatprep.subr.mxu0 0.0
        %1958 = vmatpush1.msra.mxu0 0.0
        %1959 = vmatprep.subr.mxu0 0.0
        %1960 = vmatpush1.msra.mxu0 0.0
        %1961 = vmatprep.subr.mxu0 0.0
        %1962 = vmatpush1.msra.mxu0 0.0
        %1963 = vmatprep.subr.mxu0 0.0
        %1964 = vmatpush1.msra.mxu0 0.0
        %1965 = vmatprep.subr.mxu0 0.0
        %1966 = vmatpush1.msra.mxu0 0.0
        %1967 = vmatprep.subr.mxu0 0.0
        %1968 = vmatpush1.msra.mxu0 0.0
        %1969 = vmatprep.subr.mxu0 0.0
        %1970 = vmatpush1.msra.mxu0 0.0
        %1971 = vmatprep.subr.mxu0 0.0
        %1972 = vmatpush1.msra.mxu0 0.0
        %1973 = vmatprep.subr.mxu0 0.0
        %1974 = vmatpush1.msra.mxu0 0.0
        %1975 = vmatprep.subr.mxu0 0.0
        %1976 = vmatpush1.msra.mxu0 0.0
        %1977 = vmatprep.subr.mxu0 0.0
        %1978 = vmatpush1.msra.mxu0 0.0
        %1979 = vmatprep.subr.mxu0 0.0
        %1980 = vmatpush1.msra.mxu0 0.0
        %1981 = vmatprep.subr.mxu0 0.0
        %1982 = vmatpush1.msra.mxu0 0.0
        %1983 = vmatprep.subr.mxu0 0.0
        %1984 = vmatpush1.msra.mxu0 0.0
        %1985 = vmatprep.subr.mxu0 0.0
        %1986 = vmatpush1.msra.mxu0 0.0
        %1987 = vmatprep.subr.mxu0 0.0
        %1988 = vmatpush1.msra.mxu0 0.0
        %1989 = vmatprep.subr.mxu0 0.0
        %1990 = vmatpush1.msra.mxu0 0.0
        %1991 = vmatprep.subr.mxu0 0.0
        %1992 = vmatpush1.msra.mxu0 0.0
        %1993 = vmatprep.subr.mxu0 0.0
        %1994 = vmatpush1.msra.mxu0 0.0
        %1995 = vmatprep.subr.mxu0 0.0
        %1996 = vmatpush1.msra.mxu0 0.0
        %1997 = vmatprep.subr.mxu0 0.0
        %1998 = vmatpush1.msra.mxu0 0.0
        %1999 = vmatprep.subr.mxu0 0.0
        %2000 = vmatpush1.msra.mxu0 0.0
        %2001 = vmatprep.subr.mxu0 0.0
        %2002 = vmatpush1.msra.mxu0 0.0
        %2003 = vmatprep.mubr.f32.mxu0 0.0
        %2004 = vmatmul.mubr.f32.gmra.mrb[0].mxu0 %v1934
        %v2005 = vpop.f32.mrb[0].mxu0
        %v2006 = vadd.f32 0.0, %v2005
        %v2007 = vpop.f32.mrb[0].mxu0
        %2008 = vmatprep.mubr.f32.mxu0 0.0
        %2009 = vmatmul.mubr.f32.gmra.mrb[0].mxu0 %v1937
        %v2010 = vpop.f32.mrb[0].mxu0
        %v2011 = vadd.f32 0.0, %v2010
        %v2012 = vpop.f32.mrb[0].mxu0
        %2013 = vdwg.mxu0
        %v2014 = vmul.f32 %v2006, %v969
        %v2015 = vmul.f32 %v2011, %v969
        %v2016 = vmul.f32 %v2014, %v435
        %v2017 = vmul.f32 %v2015, %v436
        %v2018 = vsel %vm465, %v2016, 0.0
        %2019 = vadd.xlane.f32.xlu0 %v2018
        %v2020 = vpop.xlane.xlu0 %2019
        %v2021 = vsel %vm978, %v2017, 0.0
        %2022 = vadd.xlane.f32.xlu0 %v2021
        %v2023 = vpop.xlane.xlu0 %2022
        %v2024 = vmul.f32 %v2020, 0.2
        %v2025 = vmul.f32 %v2023, 0.2
        %v2026 = vadd.f32 %v1765, %v2024
        %v2027 = vadd.f32 %v1766, %v2025
        %vm2028 = vcmask 1041408
        %v2029 = vsel %vm2028, %v2027, 0.0
        %v2030 = vadd.f32 %v2026, %v2029
        %v2031 = vrot.slane %v2030, 4
        %v2032 = vadd.f32 %v2030, %v2031
        %v2033 = vrot.slane %v2032, 2
        %v2034 = vadd.f32 %v2032, %v2033
        %v2035 = vrot.slane %v2034, 1
        %v2036 = vadd.f32 %v2034, %v2035
        %v2037 = vrcp.pop 10.0
        %v2038 = vmul.f32 %v2036, %v2037
        %vm2039 = vcmask 0
        %2040 = vst.msk [vmem:[%s433] sm:$0x1] %vm2039, %v2038
        %s2041 = sand.u32 %s276, 1
        %s2042 = scalar_lea.sflag [#allocation3], %s2041
        %s2043 = sand.u32 %s276, 1
        %s2044 = scalar_lea.vmem [#allocation2], %s2043
        %p2045 = scmp.lt.s32.totalorder %s27, 1
        %s2046 = scalar_select %p2045, %s27, 1
        %s2047 = scalar_lea.vmem %s12, %s2046
        // Predicated region
        $region65: #{tpu_custom_call.1} parent=63 // pred_check
          %p2048 = pneg %p286
        $region66: #{tpu_custom_call.1} parent=63 // pred_check_branch
          %2050 = sbr.rel (%p2048) target = $region68
        $region67: #{tpu_custom_call.1} parent=63 // pred_region
          %s2052 = ssub.s32 16, 16
          %2053 = vsyncadd %s2042, %s2052
          %s2054 = smul.addr %s27, 16
          %s2055 = scalar_lea.hbm %s11, %s2054
          %s2057 = sshll.u32 %s2044, 4
          %s2058 = int_to_ptr.vmem [resolvable:$true] %s2057
          %2060 = dma.vmem_to_hbm [thread:$0]  %s2058, 16, %s2055, %s2042
        $region68: #{tpu_custom_call.1} parent=63 // pred_fallthru
          _
        // Predicated region
        $region69: #{tpu_custom_call.1} parent=63 // pred_check
          %p2061 = pneg %p312
        $region70: #{tpu_custom_call.1} parent=63 // pred_check_branch
          %2063 = sbr.rel (%p2061) target = $region72
        $region71: #{tpu_custom_call.1} parent=63 // pred_region
          _
        $region72: #{tpu_custom_call.1} parent=63 // pred_fallthru
          _
      $region64: #{tpu_custom_call.1} parent=5 // pred_fallthru
        _
      %p2064 = scmp.le.s32.totalorder 2, %s22
      // Predicated region
      $region73: #{tpu_custom_call.1} parent=5 // pred_check
        %p2065 = pneg %p2064
      $region74: #{tpu_custom_call.1} parent=5 // pred_check_branch
        %2067 = sbr.rel (%p2065) target = $region76
      $region75: #{tpu_custom_call.1} parent=5 // pred_region
        %s2068 = ssub.s32 %s22, 2
        // Predicated region
        $region77: #{tpu_custom_call.1} parent=75 // pred_check
          %p2069 = pneg %p292
        $region78: #{tpu_custom_call.1} parent=75 // pred_check_branch
          %2071 = sbr.rel (%p2069) target = $region80
        $region79: #{tpu_custom_call.1} parent=75 // pred_region
          %s2072 = sand.u32 %s277, 1
          %s2073 = scalar_lea.sflag [#allocation3], %s2072
          %s2074 = sand.u32 %s277, 1
          %s2075 = scalar_lea.vmem [#allocation2], %s2074
          %2076 = dma.done %s2073, 16
        $region80: #{tpu_custom_call.1} parent=75 // pred_fallthru
          _
        // Predicated region
        $region81: #{tpu_custom_call.1} parent=75 // pred_check
          %p2077 = pneg %p318
        $region82: #{tpu_custom_call.1} parent=75 // pred_check_branch
          %2079 = sbr.rel (%p2077) target = $region84
        $region83: #{tpu_custom_call.1} parent=75 // pred_region
          %p2080 = scmp.lt.s32.totalorder %s28, 1
          %s2081 = scalar_select %p2080, %s28, 1
          %s2082 = scalar_lea.vmem %s12, %s2081
        $region84: #{tpu_custom_call.1} parent=75 // pred_fallthru
          _
      $region76: #{tpu_custom_call.1} parent=5 // pred_fallthru
        _
    $region6: #{tpu_custom_call.1} parent=1 // loop_footer
      %s26 = sadd.s32 1, %s22
    $region7: #{tpu_custom_call.1} parent=1 // loop_footer_branch
      %21 = sbr.rel target = $region3
    $region8: #{tpu_custom_call.1} parent=1 // loop_exit
      _
    %2083 = vsyncpa [#allocation3], 1
    %s2084 = scalar_lea.sflag [#allocation3], 1
    %2085 = vsyncpa %s2084, 1

</llo_original>
